<compile_context>
chip_gen: v6e
topology: v6e:2x2x1
jax: 0.10.0
libtpu: 0.0.40
codegen_flags: <defaults>
</compile_context>

<pallas_src>
import functools

import jax
import jax.numpy as jnp
from jax.experimental import pallas as pl
from jax.experimental.pallas import tpu as pltpu

TB = 8  # samples per grid step; a multiple of 8 keeps every row slice sublane-aligned


# ----------------------------------------------------------------------------
# Fused kernel: conv1+relu -> conv2+relu -> maxpool -> fc1+relu -> fc3 -> softmax
# ----------------------------------------------------------------------------
def _social_kernel(tb, obs_ref, w1_ref, b1_ref, w2_ref, b2_ref,
                   wf1_ref, bf1_ref, wf3_ref, bf3_ref, o_ref):
    # obs_ref: (3, 14, tb, 14) laid out [ci, ih, b, iw]; every intermediate matrix
    # below uses row index r = oh*tb + b (spatial-row major, batch minor).
    x = obs_ref[...]                                          # (3, 14, tb, 14)

    # ---- conv1 (3->6, 3x3, valid) as ONE (tb*12, 126) @ (126, 72) matmul ---------
    # kh / ci selection only touches untiled leading dims (free); the kw taps live in
    # the banded weights, so there is no lane-misaligned per-sample slicing here.
    taps1 = [x[c, kh:kh + 12] for kh in range(3) for c in range(3)]  # 9 x (12, tb, 14)
    s1_3d = jnp.concatenate(taps1, axis=2)                    # (12, tb, 126)
    s1 = jnp.concatenate([s1_3d[oh] for oh in range(12)], axis=0)    # (tb*12, 126)
    h1 = jnp.dot(s1, w1_ref[...], preferred_element_type=jnp.float32)
    h1 = jnp.maximum(h1 + b1_ref[...], 0.0)                   # (tb*12, 72)  lane = ow*6+co

    # ---- conv2 (6->10, 3x3, valid) as ONE (tb*10, 216) @ (216, 100) matmul -------
    # kh shift is an 8-aligned sublane slice; kw again lives in the banded weights.
    s2 = jnp.concatenate([h1[kh * tb:(kh + 10) * tb, :] for kh in range(3)], axis=1)
    z = jnp.dot(s2, w2_ref[...], preferred_element_type=jnp.float32)
    z = jnp.maximum(z + b2_ref[...], 0.0)                     # (tb*10, 100) lane = ow*10+co

    # ---- 2x2 max-pool + flatten to (tb, 250), lane order (ph, pw, co) ------------
    zc = jnp.concatenate(
        [jnp.maximum(z[:, 20 * pw:20 * pw + 10], z[:, 20 * pw + 10:20 * pw + 20])
         for pw in range(5)], axis=1)                         # (tb*10, 50)
    flat = jnp.concatenate(
        [jnp.maximum(zc[(2 * ph) * tb:(2 * ph + 1) * tb, :],
                     zc[(2 * ph + 1) * tb:(2 * ph + 2) * tb, :])
         for ph in range(5)], axis=1)                         # (tb, 250)

    # ---- MLP head: fc1 + relu -> fc3 (lane-padded to 128) -> softmax -------------
    hf = jnp.dot(flat, wf1_ref[...], preferred_element_type=jnp.float32)
    hf = jnp.maximum(hf + bf1_ref[...], 0.0)                  # (tb, 64)
    logits = jnp.dot(hf, wf3_ref[...],
                     preferred_element_type=jnp.float32) + bf3_ref[...]   # (tb, 128)
    m = jnp.max(logits, axis=-1, keepdims=True)               # pads are -1e30 -> ignored
    e = jnp.exp(logits - m)                                   # pads exp() to exactly 0
    denom = jnp.sum(e, axis=-1, keepdims=True)
    o_ref[...] = e * pl.reciprocal(denom, approx=True)        # (tb, 128) lane-dense store


def social_forward(params, obs_nchw, dim_action, *, tb=TB):
    """obs_nchw: (B, 3, 14, 14) float32 -> (B, dim_action) softmax probabilities."""
    B = obs_nchw.shape[0]
    a_pad = params["w_fc3p"].shape[1]
    n_blk = pl.cdiv(B, tb)
    b_pad = n_blk * tb
    if b_pad != B:                      # pad batch so B % tb == 0 (tail rows discarded)
        obs_nchw = jnp.pad(obs_nchw, ((0, b_pad - B), (0, 0), (0, 0), (0, 0)))
    # Put the batch in the sublane dim and width in lanes: (B,3,14,14) -> (3,14,B,14).
    obs_t = jnp.transpose(obs_nchw, (1, 2, 0, 3))

    out = pl.pallas_call(
        functools.partial(_social_kernel, tb),
        out_shape=jax.ShapeDtypeStruct((b_pad, a_pad), jnp.float32),
        grid=(n_blk,),
        in_specs=[
            pl.BlockSpec((3, 14, tb, 14), lambda i: (0, 0, i, 0)),  # obs (tb samples)
            pl.BlockSpec((126, 72), lambda i: (0, 0)),              # conv1 banded weights
            pl.BlockSpec((1, 72), lambda i: (0, 0)),                # conv1 tiled bias
            pl.BlockSpec((216, 100), lambda i: (0, 0)),             # conv2 banded weights
            pl.BlockSpec((1, 100), lambda i: (0, 0)),               # conv2 tiled bias
            pl.BlockSpec((250, 64), lambda i: (0, 0)),              # fc1 (row-permuted)
            pl.BlockSpec((1, 64), lambda i: (0, 0)),                # fc1 bias
            pl.BlockSpec((64, a_pad), lambda i: (0, 0)),            # fc3 (lane-padded)
            pl.BlockSpec((1, a_pad), lambda i: (0, 0)),             # fc3 bias (-1e30 pads)
        ],
        out_specs=pl.BlockSpec((tb, a_pad), lambda i: (i, 0)),
        compiler_params=pltpu.CompilerParams(dimension_semantics=("parallel",)),
    )(obs_t,
      params["w_conv1b"], params["b_conv1t"],
      params["w_conv2b"], params["b_conv2t"],
      params["w_fc1"], params["b_fc1"],
      params["w_fc3p"], params["b_fc3p"])
    return out[:B, :dim_action]


# ----------------------------------------------------------------------------
# Deterministic parameter init (PyTorch-style uniform) + one-time host-side
# re-layout of the weights into the kernel's banded / permuted / padded forms.
# ----------------------------------------------------------------------------
def init_params(key, dim_action):
    ks = jax.random.split(key, 8)

    def u(k, shape, fan_in):
        bound = 1.0 / float(fan_in) ** 0.5
        return jax.random.uniform(k, shape, jnp.float32, -bound, bound)

    # PyTorch-native shapes
    pt = {
        "conv1_w": u(ks[0], (6, 3, 3, 3), 3 * 9),
        "conv1_b": u(ks[1], (6,), 3 * 9),
        "conv2_w": u(ks[2], (10, 6, 3, 3), 6 * 9),
        "conv2_b": u(ks[3], (10,), 6 * 9),
        "fc1_w": u(ks[4], (64, 250), 250),
        "fc1_b": u(ks[5], (64,), 250),
        "fc3_w": u(ks[6], (dim_action, 64), 64),
        "fc3_b": u(ks[7], (dim_action,), 64),
    }

    # conv1 banded weights: row = kh*42 + ci*14 + iw, col = ow*6 + co, with
    # W[row, col] = w1[co, ci, kh, iw-ow] on the band 0 <= iw-ow < 3, else 0.
    sel1 = jnp.stack([jnp.eye(14, 12, k=-kw, dtype=jnp.float32) for kw in range(3)])
    w1p = pt["conv1_w"].transpose(2, 1, 3, 0)                    # (kh, ci, kw, co)
    w_conv1b = jnp.einsum("kiw,hckn->hciwn", sel1, w1p).reshape(126, 72)
    b_conv1t = jnp.tile(pt["conv1_b"], 12).reshape(1, 72)

    # conv2 banded weights: row = kh*72 + ow1*6 + ci, col = ow2*10 + co.
    sel2 = jnp.stack([jnp.eye(12, 10, k=-kw, dtype=jnp.float32) for kw in range(3)])
    w2p = pt["conv2_w"].transpose(2, 1, 3, 0)                    # (kh, ci, kw, co)
    w_conv2b = jnp.einsum("kiw,hckn->hicwn", sel2, w2p).reshape(216, 100)
    b_conv2t = jnp.tile(pt["conv2_b"], 10).reshape(1, 100)

    # fc1: permute input rows from PyTorch (c, ph, pw)-major flatten to the kernel's
    # (ph, pw, c)-major flatten (zero runtime cost).
    w_fc1 = (pt["fc1_w"].T.reshape(10, 5, 5, 64)
             .transpose(1, 2, 0, 3).reshape(250, 64))

    # fc3: pad the action dim up to a multiple of 128 lanes for an unmasked store;
    # padded bias lanes get -1e30 so softmax gives them exactly 0 probability.
    a_pad = ((max(dim_action, 1) + 127) // 128) * 128
    w_fc3p = jnp.zeros((64, a_pad), jnp.float32).at[:, :dim_action].set(pt["fc3_w"].T)
    b_fc3p = jnp.full((1, a_pad), -1e30, jnp.float32).at[0, :dim_action].set(pt["fc3_b"])

    kern = {
        "w_conv1b": w_conv1b, "b_conv1t": b_conv1t,
        "w_conv2b": w_conv2b, "b_conv2t": b_conv2t,
        "w_fc1": w_fc1, "b_fc1": pt["fc1_b"].reshape(1, 64),
        "w_fc3p": w_fc3p, "b_fc3p": b_fc3p,
    }
    return pt, kern


# ----------------------------------------------------------------------------
# Pure-JAX reference (mirrors the PyTorch module) for a sanity check
# ----------------------------------------------------------------------------
def social_reference(pt, obs):
    dn = ("NCHW", "OIHW", "NCHW")
    x = jax.lax.conv_general_dilated(obs, pt["conv1_w"], (1, 1), "VALID",
                                     dimension_numbers=dn)
    x = jax.nn.relu(x + pt["conv1_b"][None, :, None, None])
    x = jax.lax.conv_general_dilated(x, pt["conv2_w"], (1, 1), "VALID",
                                     dimension_numbers=dn)
    x = jax.nn.relu(x + pt["conv2_b"][None, :, None, None])
    x = jax.lax.reduce_window(x, -jnp.inf, jax.lax.max,
                              (1, 1, 2, 2), (1, 1, 2, 2), "VALID")
    x = x.reshape(x.shape[0], -1)                              # (B, 250), (c,h,w)-major
    x = jax.nn.relu(x @ pt["fc1_w"].T + pt["fc1_b"])
    x = x @ pt["fc3_w"].T + pt["fc3_b"]
    return jax.nn.softmax(x, axis=-1)


if __name__ == "__main__":
    dim_action = 5
    B = 13   # not a multiple of TB -> exercises the padding path; grid = 2 so the
             # "parallel" batch axis can actually split across v7x TensorCores.

    key = jax.random.PRNGKey(0)
    kp, ko = jax.random.split(key)
    pt_params, kern_params = init_params(kp, dim_action)

    obs = jax.random.normal(ko, (B, 3, 14, 14), jnp.float32)   # NCHW, as in PyTorch

    out = social_forward(kern_params, obs, dim_action)
    out = jax.block_until_ready(out)
    assert out.shape == (B, dim_action), out.shape

    ref = jax.block_until_ready(social_reference(pt_params, obs))
    assert jnp.allclose(out, ref, rtol=1e-2, atol=1e-2), (out, ref)
    assert jnp.allclose(jnp.sum(out, axis=-1), 1.0, atol=5e-3)

    print("KERNEL_OK")
</pallas_src>

<mosaic_0001>
module attributes {stable_mosaic.version = 11 : i64} {
  func.func @_social_kernel(%arg0: i32, %arg1: memref<3x14x8x14xf32, #tpu.memory_space<vmem>>, %arg2: memref<126x72xf32, #tpu.memory_space<vmem>>, %arg3: memref<1x72xf32, #tpu.memory_space<vmem>>, %arg4: memref<216x100xf32, #tpu.memory_space<vmem>>, %arg5: memref<1x100xf32, #tpu.memory_space<vmem>>, %arg6: memref<250x64xf32, #tpu.memory_space<vmem>>, %arg7: memref<1x64xf32, #tpu.memory_space<vmem>>, %arg8: memref<64x128xf32, #tpu.memory_space<vmem>>, %arg9: memref<1x128xf32, #tpu.memory_space<vmem>>, %arg10: memref<8x128xf32, #tpu.memory_space<vmem>>) attributes {dimension_semantics = [#tpu.dimension_semantics<parallel>], iteration_bounds = array<i64: 2>, scalar_prefetch = 0 : i64, scratch_operands = 0 : i64, tpu.core_type = #tpu.core_type<tc>, window_params = [{transform_indices = @transform_0, window_bounds = array<i64: 3, 14, 8, 14>}, {pipeline_mode = #tpu.pipeline_mode<synchronous>, transform_indices = @transform_1, window_bounds = array<i64: 126, 72>}, {pipeline_mode = #tpu.pipeline_mode<synchronous>, transform_indices = @transform_2, window_bounds = array<i64: 1, 72>}, {pipeline_mode = #tpu.pipeline_mode<synchronous>, transform_indices = @transform_3, window_bounds = array<i64: 216, 100>}, {pipeline_mode = #tpu.pipeline_mode<synchronous>, transform_indices = @transform_4, window_bounds = array<i64: 1, 100>}, {pipeline_mode = #tpu.pipeline_mode<synchronous>, transform_indices = @transform_5, window_bounds = array<i64: 250, 64>}, {pipeline_mode = #tpu.pipeline_mode<synchronous>, transform_indices = @transform_6, window_bounds = array<i64: 1, 64>}, {pipeline_mode = #tpu.pipeline_mode<synchronous>, transform_indices = @transform_7, window_bounds = array<i64: 64, 128>}, {pipeline_mode = #tpu.pipeline_mode<synchronous>, transform_indices = @transform_8, window_bounds = array<i64: 1, 128>}, {transform_indices = @transform_9, window_bounds = array<i64: 8, 128>}]} {
    %c0 = arith.constant 0 : index
    %c0_0 = arith.constant 0 : index
    %c0_1 = arith.constant 0 : index
    %c0_2 = arith.constant 0 : index
    %0 = vector.load %arg1[%c0, %c0_0, %c0_1, %c0_2] : memref<3x14x8x14xf32, #tpu.memory_space<vmem>>, vector<3x14x8x14xf32>
    %1 = vector.extract_strided_slice %0 {offsets = [0, 0, 0, 0], sizes = [1, 12, 8, 14], strides = [1, 1, 1, 1]} : vector<3x14x8x14xf32> to vector<1x12x8x14xf32>
    %2 = vector.shape_cast %1 : vector<1x12x8x14xf32> to vector<12x8x14xf32>
    %3 = vector.extract_strided_slice %0 {offsets = [1, 0, 0, 0], sizes = [1, 12, 8, 14], strides = [1, 1, 1, 1]} : vector<3x14x8x14xf32> to vector<1x12x8x14xf32>
    %4 = vector.shape_cast %3 : vector<1x12x8x14xf32> to vector<12x8x14xf32>
    %5 = vector.extract_strided_slice %0 {offsets = [2, 0, 0, 0], sizes = [1, 12, 8, 14], strides = [1, 1, 1, 1]} : vector<3x14x8x14xf32> to vector<1x12x8x14xf32>
    %6 = vector.shape_cast %5 : vector<1x12x8x14xf32> to vector<12x8x14xf32>
    %7 = vector.extract_strided_slice %0 {offsets = [0, 1, 0, 0], sizes = [1, 12, 8, 14], strides = [1, 1, 1, 1]} : vector<3x14x8x14xf32> to vector<1x12x8x14xf32>
    %8 = vector.shape_cast %7 : vector<1x12x8x14xf32> to vector<12x8x14xf32>
    %9 = vector.extract_strided_slice %0 {offsets = [1, 1, 0, 0], sizes = [1, 12, 8, 14], strides = [1, 1, 1, 1]} : vector<3x14x8x14xf32> to vector<1x12x8x14xf32>
    %10 = vector.shape_cast %9 : vector<1x12x8x14xf32> to vector<12x8x14xf32>
    %11 = vector.extract_strided_slice %0 {offsets = [2, 1, 0, 0], sizes = [1, 12, 8, 14], strides = [1, 1, 1, 1]} : vector<3x14x8x14xf32> to vector<1x12x8x14xf32>
    %12 = vector.shape_cast %11 : vector<1x12x8x14xf32> to vector<12x8x14xf32>
    %13 = vector.extract_strided_slice %0 {offsets = [0, 2, 0, 0], sizes = [1, 12, 8, 14], strides = [1, 1, 1, 1]} : vector<3x14x8x14xf32> to vector<1x12x8x14xf32>
    %14 = vector.shape_cast %13 : vector<1x12x8x14xf32> to vector<12x8x14xf32>
    %15 = vector.extract_strided_slice %0 {offsets = [1, 2, 0, 0], sizes = [1, 12, 8, 14], strides = [1, 1, 1, 1]} : vector<3x14x8x14xf32> to vector<1x12x8x14xf32>
    %16 = vector.shape_cast %15 : vector<1x12x8x14xf32> to vector<12x8x14xf32>
    %17 = vector.extract_strided_slice %0 {offsets = [2, 2, 0, 0], sizes = [1, 12, 8, 14], strides = [1, 1, 1, 1]} : vector<3x14x8x14xf32> to vector<1x12x8x14xf32>
    %18 = vector.shape_cast %17 : vector<1x12x8x14xf32> to vector<12x8x14xf32>
    %19 = tpu.concatenate %2, %4, %6, %8, %10, %12, %14, %16, %18 in 2 : vector<12x8x14xf32>, vector<12x8x14xf32>, vector<12x8x14xf32>, vector<12x8x14xf32>, vector<12x8x14xf32>, vector<12x8x14xf32>, vector<12x8x14xf32>, vector<12x8x14xf32>, vector<12x8x14xf32> -> vector<12x8x126xf32>
    %20 = vector.extract_strided_slice %19 {offsets = [0, 0, 0], sizes = [1, 8, 126], strides = [1, 1, 1]} : vector<12x8x126xf32> to vector<1x8x126xf32>
    %21 = vector.shape_cast %20 : vector<1x8x126xf32> to vector<8x126xf32>
    %22 = vector.extract_strided_slice %19 {offsets = [1, 0, 0], sizes = [1, 8, 126], strides = [1, 1, 1]} : vector<12x8x126xf32> to vector<1x8x126xf32>
    %23 = vector.shape_cast %22 : vector<1x8x126xf32> to vector<8x126xf32>
    %24 = vector.extract_strided_slice %19 {offsets = [2, 0, 0], sizes = [1, 8, 126], strides = [1, 1, 1]} : vector<12x8x126xf32> to vector<1x8x126xf32>
    %25 = vector.shape_cast %24 : vector<1x8x126xf32> to vector<8x126xf32>
    %26 = vector.extract_strided_slice %19 {offsets = [3, 0, 0], sizes = [1, 8, 126], strides = [1, 1, 1]} : vector<12x8x126xf32> to vector<1x8x126xf32>
    %27 = vector.shape_cast %26 : vector<1x8x126xf32> to vector<8x126xf32>
    %28 = vector.extract_strided_slice %19 {offsets = [4, 0, 0], sizes = [1, 8, 126], strides = [1, 1, 1]} : vector<12x8x126xf32> to vector<1x8x126xf32>
    %29 = vector.shape_cast %28 : vector<1x8x126xf32> to vector<8x126xf32>
    %30 = vector.extract_strided_slice %19 {offsets = [5, 0, 0], sizes = [1, 8, 126], strides = [1, 1, 1]} : vector<12x8x126xf32> to vector<1x8x126xf32>
    %31 = vector.shape_cast %30 : vector<1x8x126xf32> to vector<8x126xf32>
    %32 = vector.extract_strided_slice %19 {offsets = [6, 0, 0], sizes = [1, 8, 126], strides = [1, 1, 1]} : vector<12x8x126xf32> to vector<1x8x126xf32>
    %33 = vector.shape_cast %32 : vector<1x8x126xf32> to vector<8x126xf32>
    %34 = vector.extract_strided_slice %19 {offsets = [7, 0, 0], sizes = [1, 8, 126], strides = [1, 1, 1]} : vector<12x8x126xf32> to vector<1x8x126xf32>
    %35 = vector.shape_cast %34 : vector<1x8x126xf32> to vector<8x126xf32>
    %36 = vector.extract_strided_slice %19 {offsets = [8, 0, 0], sizes = [1, 8, 126], strides = [1, 1, 1]} : vector<12x8x126xf32> to vector<1x8x126xf32>
    %37 = vector.shape_cast %36 : vector<1x8x126xf32> to vector<8x126xf32>
    %38 = vector.extract_strided_slice %19 {offsets = [9, 0, 0], sizes = [1, 8, 126], strides = [1, 1, 1]} : vector<12x8x126xf32> to vector<1x8x126xf32>
    %39 = vector.shape_cast %38 : vector<1x8x126xf32> to vector<8x126xf32>
    %40 = vector.extract_strided_slice %19 {offsets = [10, 0, 0], sizes = [1, 8, 126], strides = [1, 1, 1]} : vector<12x8x126xf32> to vector<1x8x126xf32>
    %41 = vector.shape_cast %40 : vector<1x8x126xf32> to vector<8x126xf32>
    %42 = vector.extract_strided_slice %19 {offsets = [11, 0, 0], sizes = [1, 8, 126], strides = [1, 1, 1]} : vector<12x8x126xf32> to vector<1x8x126xf32>
    %43 = vector.shape_cast %42 : vector<1x8x126xf32> to vector<8x126xf32>
    %44 = tpu.concatenate %21, %23, %25, %27, %29, %31, %33, %35, %37, %39, %41, %43 in 0 : vector<8x126xf32>, vector<8x126xf32>, vector<8x126xf32>, vector<8x126xf32>, vector<8x126xf32>, vector<8x126xf32>, vector<8x126xf32>, vector<8x126xf32>, vector<8x126xf32>, vector<8x126xf32>, vector<8x126xf32>, vector<8x126xf32> -> vector<96x126xf32>
    %c0_3 = arith.constant 0 : index
    %c0_4 = arith.constant 0 : index
    %45 = vector.load %arg2[%c0_3, %c0_4] : memref<126x72xf32, #tpu.memory_space<vmem>>, vector<126x72xf32>
    %cst = arith.constant dense<0.000000e+00> : vector<96x72xf32>
    %46 = tpu.matmul %44, %45, %cst {dimension_numbers = #tpu.dot_dimension_numbers<[1], [0], [0], [1], [0, 0, 1, 1], [], []>} : vector<96x126xf32>, vector<126x72xf32>, vector<96x72xf32> -> vector<96x72xf32>
    %c0_5 = arith.constant 0 : index
    %c0_6 = arith.constant 0 : index
    %47 = vector.load %arg3[%c0_5, %c0_6] : memref<1x72xf32, #tpu.memory_space<vmem>>, vector<1x72xf32>
    %48 = vector.broadcast %47 : vector<1x72xf32> to vector<96x72xf32>
    %49 = arith.addf %46, %48 : vector<96x72xf32>
    %cst_7 = arith.constant 0.000000e+00 : f32
    %50 = vector.broadcast %cst_7 : f32 to vector<96x72xf32>
    %51 = arith.maximumf %49, %50 : vector<96x72xf32>
    %52 = vector.extract_strided_slice %51 {offsets = [0, 0], sizes = [80, 72], strides = [1, 1]} : vector<96x72xf32> to vector<80x72xf32>
    %53 = vector.extract_strided_slice %51 {offsets = [8, 0], sizes = [80, 72], strides = [1, 1]} : vector<96x72xf32> to vector<80x72xf32>
    %54 = vector.extract_strided_slice %51 {offsets = [16, 0], sizes = [80, 72], strides = [1, 1]} : vector<96x72xf32> to vector<80x72xf32>
    %55 = tpu.concatenate %52, %53, %54 in 1 : vector<80x72xf32>, vector<80x72xf32>, vector<80x72xf32> -> vector<80x216xf32>
    %c0_8 = arith.constant 0 : index
    %c0_9 = arith.constant 0 : index
    %56 = vector.load %arg4[%c0_8, %c0_9] : memref<216x100xf32, #tpu.memory_space<vmem>>, vector<216x100xf32>
    %cst_10 = arith.constant dense<0.000000e+00> : vector<80x100xf32>
    %57 = tpu.matmul %55, %56, %cst_10 {dimension_numbers = #tpu.dot_dimension_numbers<[1], [0], [0], [1], [0, 0, 1, 1], [], []>} : vector<80x216xf32>, vector<216x100xf32>, vector<80x100xf32> -> vector<80x100xf32>
    %c0_11 = arith.constant 0 : index
    %c0_12 = arith.constant 0 : index
    %58 = vector.load %arg5[%c0_11, %c0_12] : memref<1x100xf32, #tpu.memory_space<vmem>>, vector<1x100xf32>
    %59 = vector.broadcast %58 : vector<1x100xf32> to vector<80x100xf32>
    %60 = arith.addf %57, %59 : vector<80x100xf32>
    %cst_13 = arith.constant 0.000000e+00 : f32
    %61 = vector.broadcast %cst_13 : f32 to vector<80x100xf32>
    %62 = arith.maximumf %60, %61 : vector<80x100xf32>
    %63 = vector.extract_strided_slice %62 {offsets = [0, 0], sizes = [80, 10], strides = [1, 1]} : vector<80x100xf32> to vector<80x10xf32>
    %64 = vector.extract_strided_slice %62 {offsets = [0, 10], sizes = [80, 10], strides = [1, 1]} : vector<80x100xf32> to vector<80x10xf32>
    %65 = arith.maximumf %63, %64 : vector<80x10xf32>
    %66 = vector.extract_strided_slice %62 {offsets = [0, 20], sizes = [80, 10], strides = [1, 1]} : vector<80x100xf32> to vector<80x10xf32>
    %67 = vector.extract_strided_slice %62 {offsets = [0, 30], sizes = [80, 10], strides = [1, 1]} : vector<80x100xf32> to vector<80x10xf32>
    %68 = arith.maximumf %66, %67 : vector<80x10xf32>
    %69 = vector.extract_strided_slice %62 {offsets = [0, 40], sizes = [80, 10], strides = [1, 1]} : vector<80x100xf32> to vector<80x10xf32>
    %70 = vector.extract_strided_slice %62 {offsets = [0, 50], sizes = [80, 10], strides = [1, 1]} : vector<80x100xf32> to vector<80x10xf32>
    %71 = arith.maximumf %69, %70 : vector<80x10xf32>
    %72 = vector.extract_strided_slice %62 {offsets = [0, 60], sizes = [80, 10], strides = [1, 1]} : vector<80x100xf32> to vector<80x10xf32>
    %73 = vector.extract_strided_slice %62 {offsets = [0, 70], sizes = [80, 10], strides = [1, 1]} : vector<80x100xf32> to vector<80x10xf32>
    %74 = arith.maximumf %72, %73 : vector<80x10xf32>
    %75 = vector.extract_strided_slice %62 {offsets = [0, 80], sizes = [80, 10], strides = [1, 1]} : vector<80x100xf32> to vector<80x10xf32>
    %76 = vector.extract_strided_slice %62 {offsets = [0, 90], sizes = [80, 10], strides = [1, 1]} : vector<80x100xf32> to vector<80x10xf32>
    %77 = arith.maximumf %75, %76 : vector<80x10xf32>
    %78 = tpu.concatenate %65, %68, %71, %74, %77 in 1 : vector<80x10xf32>, vector<80x10xf32>, vector<80x10xf32>, vector<80x10xf32>, vector<80x10xf32> -> vector<80x50xf32>
    %79 = vector.extract_strided_slice %78 {offsets = [0, 0], sizes = [8, 50], strides = [1, 1]} : vector<80x50xf32> to vector<8x50xf32>
    %80 = vector.extract_strided_slice %78 {offsets = [8, 0], sizes = [8, 50], strides = [1, 1]} : vector<80x50xf32> to vector<8x50xf32>
    %81 = arith.maximumf %79, %80 : vector<8x50xf32>
    %82 = vector.extract_strided_slice %78 {offsets = [16, 0], sizes = [8, 50], strides = [1, 1]} : vector<80x50xf32> to vector<8x50xf32>
    %83 = vector.extract_strided_slice %78 {offsets = [24, 0], sizes = [8, 50], strides = [1, 1]} : vector<80x50xf32> to vector<8x50xf32>
    %84 = arith.maximumf %82, %83 : vector<8x50xf32>
    %85 = vector.extract_strided_slice %78 {offsets = [32, 0], sizes = [8, 50], strides = [1, 1]} : vector<80x50xf32> to vector<8x50xf32>
    %86 = vector.extract_strided_slice %78 {offsets = [40, 0], sizes = [8, 50], strides = [1, 1]} : vector<80x50xf32> to vector<8x50xf32>
    %87 = arith.maximumf %85, %86 : vector<8x50xf32>
    %88 = vector.extract_strided_slice %78 {offsets = [48, 0], sizes = [8, 50], strides = [1, 1]} : vector<80x50xf32> to vector<8x50xf32>
    %89 = vector.extract_strided_slice %78 {offsets = [56, 0], sizes = [8, 50], strides = [1, 1]} : vector<80x50xf32> to vector<8x50xf32>
    %90 = arith.maximumf %88, %89 : vector<8x50xf32>
    %91 = vector.extract_strided_slice %78 {offsets = [64, 0], sizes = [8, 50], strides = [1, 1]} : vector<80x50xf32> to vector<8x50xf32>
    %92 = vector.extract_strided_slice %78 {offsets = [72, 0], sizes = [8, 50], strides = [1, 1]} : vector<80x50xf32> to vector<8x50xf32>
    %93 = arith.maximumf %91, %92 : vector<8x50xf32>
    %94 = tpu.concatenate %81, %84, %87, %90, %93 in 1 : vector<8x50xf32>, vector<8x50xf32>, vector<8x50xf32>, vector<8x50xf32>, vector<8x50xf32> -> vector<8x250xf32>
    %c0_14 = arith.constant 0 : index
    %c0_15 = arith.constant 0 : index
    %95 = vector.load %arg6[%c0_14, %c0_15] : memref<250x64xf32, #tpu.memory_space<vmem>>, vector<250x64xf32>
    %cst_16 = arith.constant dense<0.000000e+00> : vector<8x64xf32>
    %96 = tpu.matmul %94, %95, %cst_16 {dimension_numbers = #tpu.dot_dimension_numbers<[1], [0], [0], [1], [0, 0, 1, 1], [], []>} : vector<8x250xf32>, vector<250x64xf32>, vector<8x64xf32> -> vector<8x64xf32>
    %c0_17 = arith.constant 0 : index
    %c0_18 = arith.constant 0 : index
    %97 = vector.load %arg7[%c0_17, %c0_18] : memref<1x64xf32, #tpu.memory_space<vmem>>, vector<1x64xf32>
    %98 = vector.broadcast %97 : vector<1x64xf32> to vector<8x64xf32>
    %99 = arith.addf %96, %98 : vector<8x64xf32>
    %cst_19 = arith.constant 0.000000e+00 : f32
    %100 = vector.broadcast %cst_19 : f32 to vector<8x64xf32>
    %101 = arith.maximumf %99, %100 : vector<8x64xf32>
    %c0_20 = arith.constant 0 : index
    %c0_21 = arith.constant 0 : index
    %102 = vector.load %arg8[%c0_20, %c0_21] : memref<64x128xf32, #tpu.memory_space<vmem>>, vector<64x128xf32>
    %cst_22 = arith.constant dense<0.000000e+00> : vector<8x128xf32>
    %103 = tpu.matmul %101, %102, %cst_22 {dimension_numbers = #tpu.dot_dimension_numbers<[1], [0], [0], [1], [0, 0, 1, 1], [], []>} : vector<8x64xf32>, vector<64x128xf32>, vector<8x128xf32> -> vector<8x128xf32>
    %c0_23 = arith.constant 0 : index
    %c0_24 = arith.constant 0 : index
    %104 = vector.load %arg9[%c0_23, %c0_24] : memref<1x128xf32, #tpu.memory_space<vmem>>, vector<1x128xf32>
    %105 = vector.broadcast %104 : vector<1x128xf32> to vector<8x128xf32>
    %106 = arith.addf %103, %105 : vector<8x128xf32>
    %cst_25 = arith.constant dense<0xFF800000> : vector<8xf32>
    %107 = vector.multi_reduction <maximumf>, %106, %cst_25 [1] : vector<8x128xf32> to vector<8xf32>
    %108 = vector.shape_cast %107 : vector<8xf32> to vector<8x1xf32>
    %109 = vector.broadcast %108 : vector<8x1xf32> to vector<8x128xf32>
    %110 = arith.subf %106, %109 : vector<8x128xf32>
    %111 = math.exp %110 : vector<8x128xf32>
    %cst_26 = arith.constant dense<0.000000e+00> : vector<8xf32>
    %112 = vector.multi_reduction <add>, %111, %cst_26 [1] : vector<8x128xf32> to vector<8xf32>
    %113 = vector.shape_cast %112 : vector<8xf32> to vector<8x1xf32>
    %114 = tpu.reciprocal %113 {approx = true} : vector<8x1xf32> -> vector<8x1xf32>
    %115 = vector.broadcast %114 : vector<8x1xf32> to vector<8x128xf32>
    %116 = arith.mulf %111, %115 : vector<8x128xf32>
    %c0_27 = arith.constant 0 : index
    %c0_28 = arith.constant 0 : index
    %117 = vector.load %arg10[%c0_27, %c0_28] : memref<8x128xf32, #tpu.memory_space<vmem>>, vector<8x128xf32>
    tpu.vector_store %arg10[%c0_27, %c0_28], %116 {strides = array<i32>} : memref<8x128xf32, #tpu.memory_space<vmem>>, vector<8x128xf32>,
    return
  }
  func.func @transform_0(%arg0: i32) -> (i32, i32, i32, i32) {
    %c0_i32 = arith.constant 0 : i32
    %c0_i32_0 = arith.constant 0 : i32
    %c0_i32_1 = arith.constant 0 : i32
    %c0_i32_2 = arith.constant 0 : i32
    return %c0_i32, %c0_i32_0, %arg0, %c0_i32_1 : i32, i32, i32, i32
  }
  func.func @transform_1(%arg0: i32) -> (i32, i32) {
    %c0_i32 = arith.constant 0 : i32
    %c0_i32_0 = arith.constant 0 : i32
    %c0_i32_1 = arith.constant 0 : i32
    return %c0_i32, %c0_i32_0 : i32, i32
  }
  func.func @transform_2(%arg0: i32) -> (i32, i32) {
    %c0_i32 = arith.constant 0 : i32
    %c0_i32_0 = arith.constant 0 : i32
    %c0_i32_1 = arith.constant 0 : i32
    return %c0_i32, %c0_i32_0 : i32, i32
  }
  func.func @transform_3(%arg0: i32) -> (i32, i32) {
    %c0_i32 = arith.constant 0 : i32
    %c0_i32_0 = arith.constant 0 : i32
    %c0_i32_1 = arith.constant 0 : i32
    return %c0_i32, %c0_i32_0 : i32, i32
  }
  func.func @transform_4(%arg0: i32) -> (i32, i32) {
    %c0_i32 = arith.constant 0 : i32
    %c0_i32_0 = arith.constant 0 : i32
    %c0_i32_1 = arith.constant 0 : i32
    return %c0_i32, %c0_i32_0 : i32, i32
  }
  func.func @transform_5(%arg0: i32) -> (i32, i32) {
    %c0_i32 = arith.constant 0 : i32
    %c0_i32_0 = arith.constant 0 : i32
    %c0_i32_1 = arith.constant 0 : i32
    return %c0_i32, %c0_i32_0 : i32, i32
  }
  func.func @transform_6(%arg0: i32) -> (i32, i32) {
    %c0_i32 = arith.constant 0 : i32
    %c0_i32_0 = arith.constant 0 : i32
    %c0_i32_1 = arith.constant 0 : i32
    return %c0_i32, %c0_i32_0 : i32, i32
  }
  func.func @transform_7(%arg0: i32) -> (i32, i32) {
    %c0_i32 = arith.constant 0 : i32
    %c0_i32_0 = arith.constant 0 : i32
    %c0_i32_1 = arith.constant 0 : i32
    return %c0_i32, %c0_i32_0 : i32, i32
  }
  func.func @transform_8(%arg0: i32) -> (i32, i32) {
    %c0_i32 = arith.constant 0 : i32
    %c0_i32_0 = arith.constant 0 : i32
    %c0_i32_1 = arith.constant 0 : i32
    return %c0_i32, %c0_i32_0 : i32, i32
  }
  func.func @transform_9(%arg0: i32) -> (i32, i32) {
    %c0_i32 = arith.constant 0 : i32
    %c0_i32_0 = arith.constant 0 : i32
    return %arg0, %c0_i32 : i32, i32
  }
}

</mosaic_0001>

<llo_original>
// kernel: tpu_custom_call.1
$region0: #{tpu_custom_call.1}
  #allocation0 [shape = 'u32[]', space=smem, size = 0x4, offset = 0x4, fixed_abs, tag = 'smem constant byte address 0x4 - core index']
  #allocation1 [shape = 'u32[144,128]{1,0:T(1,128)}', space=vmem, size = 0x12000, scoped, tag = 'internal scratch']
  %s0 = inlined_call_operand.vmem [shape: f32[3,14,16,14], index: 0, kind: input, shape index: {}]
  %s1 = inlined_call_operand.vmem [shape: f32[126,72], index: 1, kind: input, shape index: {}]
  %s2 = inlined_call_operand.vmem [shape: f32[1,72], index: 2, kind: input, shape index: {}]
  %s3 = inlined_call_operand.vmem [shape: f32[216,100], index: 3, kind: input, shape index: {}]
  %s4 = inlined_call_operand.vmem [shape: f32[1,100], index: 4, kind: input, shape index: {}]
  %s5 = inlined_call_operand.vmem [shape: f32[250,64], index: 5, kind: input, shape index: {}]
  %s6 = inlined_call_operand.vmem [shape: f32[1,64], index: 6, kind: input, shape index: {}]
  %s7 = inlined_call_operand.vmem [shape: f32[64,128], index: 7, kind: input, shape index: {}]
  %s8 = inlined_call_operand.vmem [shape: f32[1,128], index: 8, kind: input, shape index: {}]
  %s9 = inlined_call_operand.hbm [shape: f32[16,128], index: 9, kind: output, shape index: {}]
  %s10 = sld [smem:[#allocation0]]
  $region107: #{tpu_custom_call.1} parent=0
    _
  %s12 = ssub.s32 1, %s10
  %s13 = scalar_select 0, %s12, %s10
  $region1: #{tpu_custom_call.1} parent=0
    #allocation2 [shape = 'u8[344064]{0}', space=vmem, size = 0x54000, scoped, tag = 'input window, operand 0']
    #allocation3 [shape = 'u8[8192]{0}', space=vmem, size = 0x2000, scoped, tag = 'output window, operand 0']
    #allocation4 [shape = 's32[2]{0}', space=sflag, size = 0x8, scoped, tag = 'scoped memory for tpu_custom_call.1']
    %14 = vsyncpa [#allocation4], 0
    %s15 = scalar_lea.sflag [#allocation4], 1
    %16 = vsyncpa %s15, 0
    loop: start=0, step=1, limit=4
    $region2: #{tpu_custom_call.1} parent=1 // loop_pre_header
      _
    $region3: #{tpu_custom_call.1} parent=1 // loop_header
      %s18 = sphi 0, %s22
      %p19 = scmp.ge.s32.totalorder %s18, 4
      %s28 = sphi 0, %s30
      %s31 = sphi 0, %s28
      %s32 = sphi 0, %s31
      %s48 = sphi 0, %s32
      %s52 = sphi 0, %s52
      %s54 = sphi 0, %s52
      %s55 = sphi 0, %s54
      %s69 = sphi 0, %s55
      %s73 = sphi 0, %s73
      %s75 = sphi 0, %s73
      %s76 = sphi 0, %s75
      %s90 = sphi 0, %s76
      %s94 = sphi 0, %s94
      %s96 = sphi 0, %s94
      %s97 = sphi 0, %s96
      %s111 = sphi 0, %s97
      %s115 = sphi 0, %s115
      %s117 = sphi 0, %s115
      %s118 = sphi 0, %s117
      %s132 = sphi 0, %s118
      %s136 = sphi 0, %s136
      %s138 = sphi 0, %s136
      %s139 = sphi 0, %s138
      %s153 = sphi 0, %s139
      %s157 = sphi 0, %s157
      %s159 = sphi 0, %s157
      %s160 = sphi 0, %s159
      %s174 = sphi 0, %s160
      %s178 = sphi 0, %s178
      %s180 = sphi 0, %s178
      %s181 = sphi 0, %s180
      %s195 = sphi 0, %s181
      %s199 = sphi 0, %s199
      %s201 = sphi 0, %s199
      %s202 = sphi 0, %s201
      %s216 = sphi 0, %s202
      %s222 = sphi 0, %s224
      %s225 = sphi 0, %s222
      %s226 = sphi 0, %s225
      %s242 = sphi 0, %s226
    $region4: #{tpu_custom_call.1} parent=1 // loop_header_branch
      %21 = sbr.rel (%p19) target = $region8
    $region5: #{tpu_custom_call.1} parent=1 // loop_body
      %s23 = ssub.s32 %s18, 1
      %s24 = ssub.s32 %s18, 2
      %s25 = sadd.s32 %s18, 1
      %s26 = ssub.s32 %s18, %s25
      %p27 = scmp.eq.s32.totalorder %s26, 0
      %s29 = sadd.s32 %s28, 1
      %s30 = scalar_select %p27, %s28, %s29
      %p33 = pneg %p27
      %p34 = scmp.eq.s32.totalorder %s18, 1
      %p35 = por %p33, %p34
      %p36 = scmp.ne.s32.totalorder %s28, %s31
      %p37 = scmp.eq.s32.totalorder %s18, 0
      %p38 = por %p36, %p37
      %p39 = scmp.ne.s32.totalorder %s28, %s31
      %p40 = scmp.eq.s32.totalorder %s23, 1
      %p41 = por %p39, %p40
      %p42 = scmp.ne.s32.totalorder %s31, %s32
      %p43 = scmp.eq.s32.totalorder %s23, 0
      %p44 = por %p42, %p43
      %p45 = scmp.ne.s32.totalorder %s31, %s32
      %p46 = scmp.eq.s32.totalorder %s24, 1
      %p47 = por %p45, %p46
      %p49 = scmp.ne.s32.totalorder %s32, %s48
      %p50 = scmp.eq.s32.totalorder %s24, 0
      %p51 = por %p49, %p50
      %s53 = sadd.s32 %s52, 1
      %p56 = scmp.eq.s32.totalorder %s18, 1
      %p57 = scmp.ne.s32.totalorder %s52, %s54
      %p58 = scmp.eq.s32.totalorder %s18, 0
      %p59 = por %p57, %p58
      %p60 = scmp.ne.s32.totalorder %s52, %s54
      %p61 = scmp.eq.s32.totalorder %s23, 1
      %p62 = por %p60, %p61
      %p63 = scmp.ne.s32.totalorder %s54, %s55
      %p64 = scmp.eq.s32.totalorder %s23, 0
      %p65 = por %p63, %p64
      %p66 = scmp.ne.s32.totalorder %s54, %s55
      %p67 = scmp.eq.s32.totalorder %s24, 1
      %p68 = por %p66, %p67
      %p70 = scmp.ne.s32.totalorder %s55, %s69
      %p71 = scmp.eq.s32.totalorder %s24, 0
      %p72 = por %p70, %p71
      %s74 = sadd.s32 %s73, 1
      %p77 = scmp.eq.s32.totalorder %s18, 1
      %p78 = scmp.ne.s32.totalorder %s73, %s75
      %p79 = scmp.eq.s32.totalorder %s18, 0
      %p80 = por %p78, %p79
      %p81 = scmp.ne.s32.totalorder %s73, %s75
      %p82 = scmp.eq.s32.totalorder %s23, 1
      %p83 = por %p81, %p82
      %p84 = scmp.ne.s32.totalorder %s75, %s76
      %p85 = scmp.eq.s32.totalorder %s23, 0
      %p86 = por %p84, %p85
      %p87 = scmp.ne.s32.totalorder %s75, %s76
      %p88 = scmp.eq.s32.totalorder %s24, 1
      %p89 = por %p87, %p88
      %p91 = scmp.ne.s32.totalorder %s76, %s90
      %p92 = scmp.eq.s32.totalorder %s24, 0
      %p93 = por %p91, %p92
      %s95 = sadd.s32 %s94, 1
      %p98 = scmp.eq.s32.totalorder %s18, 1
      %p99 = scmp.ne.s32.totalorder %s94, %s96
      %p100 = scmp.eq.s32.totalorder %s18, 0
      %p101 = por %p99, %p100
      %p102 = scmp.ne.s32.totalorder %s94, %s96
      %p103 = scmp.eq.s32.totalorder %s23, 1
      %p104 = por %p102, %p103
      %p105 = scmp.ne.s32.totalorder %s96, %s97
      %p106 = scmp.eq.s32.totalorder %s23, 0
      %p107 = por %p105, %p106
      %p108 = scmp.ne.s32.totalorder %s96, %s97
      %p109 = scmp.eq.s32.totalorder %s24, 1
      %p110 = por %p108, %p109
      %p112 = scmp.ne.s32.totalorder %s97, %s111
      %p113 = scmp.eq.s32.totalorder %s24, 0
      %p114 = por %p112, %p113
      %s116 = sadd.s32 %s115, 1
      %p119 = scmp.eq.s32.totalorder %s18, 1
      %p120 = scmp.ne.s32.totalorder %s115, %s117
      %p121 = scmp.eq.s32.totalorder %s18, 0
      %p122 = por %p120, %p121
      %p123 = scmp.ne.s32.totalorder %s115, %s117
      %p124 = scmp.eq.s32.totalorder %s23, 1
      %p125 = por %p123, %p124
      %p126 = scmp.ne.s32.totalorder %s117, %s118
      %p127 = scmp.eq.s32.totalorder %s23, 0
      %p128 = por %p126, %p127
      %p129 = scmp.ne.s32.totalorder %s117, %s118
      %p130 = scmp.eq.s32.totalorder %s24, 1
      %p131 = por %p129, %p130
      %p133 = scmp.ne.s32.totalorder %s118, %s132
      %p134 = scmp.eq.s32.totalorder %s24, 0
      %p135 = por %p133, %p134
      %s137 = sadd.s32 %s136, 1
      %p140 = scmp.eq.s32.totalorder %s18, 1
      %p141 = scmp.ne.s32.totalorder %s136, %s138
      %p142 = scmp.eq.s32.totalorder %s18, 0
      %p143 = por %p141, %p142
      %p144 = scmp.ne.s32.totalorder %s136, %s138
      %p145 = scmp.eq.s32.totalorder %s23, 1
      %p146 = por %p144, %p145
      %p147 = scmp.ne.s32.totalorder %s138, %s139
      %p148 = scmp.eq.s32.totalorder %s23, 0
      %p149 = por %p147, %p148
      %p150 = scmp.ne.s32.totalorder %s138, %s139
      %p151 = scmp.eq.s32.totalorder %s24, 1
      %p152 = por %p150, %p151
      %p154 = scmp.ne.s32.totalorder %s139, %s153
      %p155 = scmp.eq.s32.totalorder %s24, 0
      %p156 = por %p154, %p155
      %s158 = sadd.s32 %s157, 1
      %p161 = scmp.eq.s32.totalorder %s18, 1
      %p162 = scmp.ne.s32.totalorder %s157, %s159
      %p163 = scmp.eq.s32.totalorder %s18, 0
      %p164 = por %p162, %p163
      %p165 = scmp.ne.s32.totalorder %s157, %s159
      %p166 = scmp.eq.s32.totalorder %s23, 1
      %p167 = por %p165, %p166
      %p168 = scmp.ne.s32.totalorder %s159, %s160
      %p169 = scmp.eq.s32.totalorder %s23, 0
      %p170 = por %p168, %p169
      %p171 = scmp.ne.s32.totalorder %s159, %s160
      %p172 = scmp.eq.s32.totalorder %s24, 1
      %p173 = por %p171, %p172
      %p175 = scmp.ne.s32.totalorder %s160, %s174
      %p176 = scmp.eq.s32.totalorder %s24, 0
      %p177 = por %p175, %p176
      %s179 = sadd.s32 %s178, 1
      %p182 = scmp.eq.s32.totalorder %s18, 1
      %p183 = scmp.ne.s32.totalorder %s178, %s180
      %p184 = scmp.eq.s32.totalorder %s18, 0
      %p185 = por %p183, %p184
      %p186 = scmp.ne.s32.totalorder %s178, %s180
      %p187 = scmp.eq.s32.totalorder %s23, 1
      %p188 = por %p186, %p187
      %p189 = scmp.ne.s32.totalorder %s180, %s181
      %p190 = scmp.eq.s32.totalorder %s23, 0
      %p191 = por %p189, %p190
      %p192 = scmp.ne.s32.totalorder %s180, %s181
      %p193 = scmp.eq.s32.totalorder %s24, 1
      %p194 = por %p192, %p193
      %p196 = scmp.ne.s32.totalorder %s181, %s195
      %p197 = scmp.eq.s32.totalorder %s24, 0
      %p198 = por %p196, %p197
      %s200 = sadd.s32 %s199, 1
      %p203 = scmp.eq.s32.totalorder %s18, 1
      %p204 = scmp.ne.s32.totalorder %s199, %s201
      %p205 = scmp.eq.s32.totalorder %s18, 0
      %p206 = por %p204, %p205
      %p207 = scmp.ne.s32.totalorder %s199, %s201
      %p208 = scmp.eq.s32.totalorder %s23, 1
      %p209 = por %p207, %p208
      %p210 = scmp.ne.s32.totalorder %s201, %s202
      %p211 = scmp.eq.s32.totalorder %s23, 0
      %p212 = por %p210, %p211
      %p213 = scmp.ne.s32.totalorder %s201, %s202
      %p214 = scmp.eq.s32.totalorder %s24, 1
      %p215 = por %p213, %p214
      %p217 = scmp.ne.s32.totalorder %s202, %s216
      %p218 = scmp.eq.s32.totalorder %s24, 0
      %p219 = por %p217, %p218
      %s220 = ssub.s32 %s18, %s25
      %p221 = scmp.eq.s32.totalorder %s220, 0
      %s223 = sadd.s32 %s222, 1
      %s224 = scalar_select %p221, %s222, %s223
      %p227 = pneg %p221
      %p228 = scmp.eq.s32.totalorder %s18, 1
      %p229 = por %p227, %p228
      %p230 = scmp.ne.s32.totalorder %s222, %s225
      %p231 = scmp.eq.s32.totalorder %s18, 0
      %p232 = por %p230, %p231
      %p233 = scmp.ne.s32.totalorder %s222, %s225
      %p234 = scmp.eq.s32.totalorder %s23, 1
      %p235 = por %p233, %p234
      %p236 = scmp.ne.s32.totalorder %s225, %s226
      %p237 = scmp.eq.s32.totalorder %s23, 0
      %p238 = por %p236, %p237
      %p239 = scmp.ne.s32.totalorder %s225, %s226
      %p240 = scmp.eq.s32.totalorder %s24, 1
      %p241 = por %p239, %p240
      %p243 = scmp.ne.s32.totalorder %s226, %s242
      %p244 = scmp.eq.s32.totalorder %s24, 0
      %p245 = por %p243, %p244
      %p246 = scmp.le.s32.totalorder 1, %s18
      %p247 = scmp.lt.s32.totalorder %s18, 3
      %p248 = pnand %p246, %p247
      %p249 = pneg %p248
      // Predicated region
      $region9: #{tpu_custom_call.1} parent=5 // pred_check
        _
      $region10: #{tpu_custom_call.1} parent=5 // pred_check_branch
        %251 = sbr.rel (%p248) target = $region12
      $region11: #{tpu_custom_call.1} parent=5 // pred_region
        %s252 = ssub.s32 %s18, 1
        // Predicated region
        $region13: #{tpu_custom_call.1} parent=11 // pred_check
          %p253 = pneg %p65
        $region14: #{tpu_custom_call.1} parent=11 // pred_check_branch
          %255 = sbr.rel (%p253) target = $region16
        $region15: #{tpu_custom_call.1} parent=11 // pred_region
          _
        $region16: #{tpu_custom_call.1} parent=11 // pred_fallthru
          _
        // Predicated region
        $region17: #{tpu_custom_call.1} parent=11 // pred_check
          %p256 = pneg %p86
        $region18: #{tpu_custom_call.1} parent=11 // pred_check_branch
          %258 = sbr.rel (%p256) target = $region20
        $region19: #{tpu_custom_call.1} parent=11 // pred_region
          _
        $region20: #{tpu_custom_call.1} parent=11 // pred_fallthru
          _
        // Predicated region
        $region21: #{tpu_custom_call.1} parent=11 // pred_check
          %p259 = pneg %p107
        $region22: #{tpu_custom_call.1} parent=11 // pred_check_branch
          %261 = sbr.rel (%p259) target = $region24
        $region23: #{tpu_custom_call.1} parent=11 // pred_region
          _
        $region24: #{tpu_custom_call.1} parent=11 // pred_fallthru
          _
        // Predicated region
        $region25: #{tpu_custom_call.1} parent=11 // pred_check
          %p262 = pneg %p128
        $region26: #{tpu_custom_call.1} parent=11 // pred_check_branch
          %264 = sbr.rel (%p262) target = $region28
        $region27: #{tpu_custom_call.1} parent=11 // pred_region
          _
        $region28: #{tpu_custom_call.1} parent=11 // pred_fallthru
          _
        // Predicated region
        $region29: #{tpu_custom_call.1} parent=11 // pred_check
          %p265 = pneg %p149
        $region30: #{tpu_custom_call.1} parent=11 // pred_check_branch
          %267 = sbr.rel (%p265) target = $region32
        $region31: #{tpu_custom_call.1} parent=11 // pred_region
          _
        $region32: #{tpu_custom_call.1} parent=11 // pred_fallthru
          _
        // Predicated region
        $region33: #{tpu_custom_call.1} parent=11 // pred_check
          %p268 = pneg %p170
        $region34: #{tpu_custom_call.1} parent=11 // pred_check_branch
          %270 = sbr.rel (%p268) target = $region36
        $region35: #{tpu_custom_call.1} parent=11 // pred_region
          _
        $region36: #{tpu_custom_call.1} parent=11 // pred_fallthru
          _
        // Predicated region
        $region37: #{tpu_custom_call.1} parent=11 // pred_check
          %p271 = pneg %p191
        $region38: #{tpu_custom_call.1} parent=11 // pred_check_branch
          %273 = sbr.rel (%p271) target = $region40
        $region39: #{tpu_custom_call.1} parent=11 // pred_region
          _
        $region40: #{tpu_custom_call.1} parent=11 // pred_fallthru
          _
        // Predicated region
        $region41: #{tpu_custom_call.1} parent=11 // pred_check
          %p274 = pneg %p212
        $region42: #{tpu_custom_call.1} parent=11 // pred_check_branch
          %276 = sbr.rel (%p274) target = $region44
        $region43: #{tpu_custom_call.1} parent=11 // pred_region
          _
        $region44: #{tpu_custom_call.1} parent=11 // pred_fallthru
          _
      $region12: #{tpu_custom_call.1} parent=5 // pred_fallthru
        _
      %p277 = scmp.lt.s32.totalorder %s18, 2
      // Predicated region
      $region45: #{tpu_custom_call.1} parent=5 // pred_check
        %p278 = pneg %p277
      $region46: #{tpu_custom_call.1} parent=5 // pred_check_branch
        %280 = sbr.rel (%p278) target = $region48
      $region47: #{tpu_custom_call.1} parent=5 // pred_region
        // Predicated region
        $region49: #{tpu_custom_call.1} parent=47 // pred_check
          %p281 = pneg %p38
        $region50: #{tpu_custom_call.1} parent=47 // pred_check_branch
          %283 = sbr.rel (%p281) target = $region52
        $region51: #{tpu_custom_call.1} parent=47 // pred_region
          %s284 = sand.u32 %s28, 1
          %s285 = sand.u32 %s28, 1
          %s286 = smul.addr %s285, 336
          %s287 = scalar_lea.vmem [#allocation2], %s286
          %s288 = smul.addr %s18, 8
          %s289 = scalar_lea.vmem %s0, %s288
          // Predicated region
          $region53: #{tpu_custom_call.1} parent=51 // pred_check
            _
          $region54: #{tpu_custom_call.1} parent=51 // pred_check_branch
            %291 = sbr.rel (0) target = $region56
          $region55: #{tpu_custom_call.1} parent=51 // pred_region
            // Predicated region
            $region57: #{tpu_custom_call.1} parent=55 // pred_check
              _
            $region58: #{tpu_custom_call.1} parent=55 // pred_check_branch
              %293 = sbr.rel (0) target = $region60
            $region59: #{tpu_custom_call.1} parent=55 // pred_region
              // Predicated region
              $region72: #{tpu_custom_call.1} parent=59 // pred_check
                _
              $region73: #{tpu_custom_call.1} parent=59 // pred_check_branch
                %391 = sbr.rel (0) target = $region75
              $region74: #{tpu_custom_call.1} parent=59 // pred_region
                loop: start=0, step=1, limit=1
                $region76: #{tpu_custom_call.1} parent=74 // loop_pre_header
                  _
                $region77: #{tpu_custom_call.1} parent=74 // loop_header
                  %s393 = sphi 0, %s397
                  %p394 = scmp.ge.s32.totalorder %s393, 1
                  %s398 = sphi %s289, %s289
                  %s399 = sphi %s287, %s287
                $region78: #{tpu_custom_call.1} parent=74 // loop_header_branch
                  %396 = sbr.rel (%p394) target = $region82
                $region79: #{tpu_custom_call.1} parent=74 // loop_body
                  %v400 = vld [vmem:[%s398] sm:$0xff]
                  %401 = vst [vmem:[%s399] sm:$0xff] %v400
                  %v402 = vld [vmem:[%s398 + $0x10] sm:$0xff]
                  %403 = vst [vmem:[%s399 + $0x8] sm:$0xff] %v402
                  %v404 = vld [vmem:[%s398 + $0x20] sm:$0xff]
                  %405 = vst [vmem:[%s399 + $0x10] sm:$0xff] %v404
                  %v406 = vld [vmem:[%s398 + $0x30] sm:$0xff]
                  %407 = vst [vmem:[%s399 + $0x18] sm:$0xff] %v406
                  %v408 = vld [vmem:[%s398 + $0x40] sm:$0xff]
                  %409 = vst [vmem:[%s399 + $0x20] sm:$0xff] %v408
                  %v410 = vld [vmem:[%s398 + $0x50] sm:$0xff]
                  %411 = vst [vmem:[%s399 + $0x28] sm:$0xff] %v410
                  %v412 = vld [vmem:[%s398 + $0x60] sm:$0xff]
                  %413 = vst [vmem:[%s399 + $0x30] sm:$0xff] %v412
                  %v414 = vld [vmem:[%s398 + $0x70] sm:$0xff]
                  %415 = vst [vmem:[%s399 + $0x38] sm:$0xff] %v414
                  %v416 = vld [vmem:[%s398 + $0x80] sm:$0xff]
                  %417 = vst [vmem:[%s399 + $0x40] sm:$0xff] %v416
                  %v418 = vld [vmem:[%s398 + $0x90] sm:$0xff]
                  %419 = vst [vmem:[%s399 + $0x48] sm:$0xff] %v418
                  %v420 = vld [vmem:[%s398 + $0xa0] sm:$0xff]
                  %421 = vst [vmem:[%s399 + $0x50] sm:$0xff] %v420
                  %v422 = vld [vmem:[%s398 + $0xb0] sm:$0xff]
                  %423 = vst [vmem:[%s399 + $0x58] sm:$0xff] %v422
                  %v424 = vld [vmem:[%s398 + $0xc0] sm:$0xff]
                  %425 = vst [vmem:[%s399 + $0x60] sm:$0xff] %v424
                  %v426 = vld [vmem:[%s398 + $0xd0] sm:$0xff]
                  %427 = vst [vmem:[%s399 + $0x68] sm:$0xff] %v426
                  %v428 = vld [vmem:[%s398 + $0xe0] sm:$0xff]
                  %429 = vst [vmem:[%s399 + $0x70] sm:$0xff] %v428
                  %v430 = vld [vmem:[%s398 + $0xf0] sm:$0xff]
                  %431 = vst [vmem:[%s399 + $0x78] sm:$0xff] %v430
                  %v432 = vld [vmem:[%s398 + $0x100] sm:$0xff]
                  %433 = vst [vmem:[%s399 + $0x80] sm:$0xff] %v432
                  %v434 = vld [vmem:[%s398 + $0x110] sm:$0xff]
                  %435 = vst [vmem:[%s399 + $0x88] sm:$0xff] %v434
                  %v436 = vld [vmem:[%s398 + $0x120] sm:$0xff]
                  %437 = vst [vmem:[%s399 + $0x90] sm:$0xff] %v436
                  %v438 = vld [vmem:[%s398 + $0x130] sm:$0xff]
                  %439 = vst [vmem:[%s399 + $0x98] sm:$0xff] %v438
                  %v440 = vld [vmem:[%s398 + $0x140] sm:$0xff]
                  %441 = vst [vmem:[%s399 + $0xa0] sm:$0xff] %v440
                  %v442 = vld [vmem:[%s398 + $0x150] sm:$0xff]
                  %443 = vst [vmem:[%s399 + $0xa8] sm:$0xff] %v442
                  %v444 = vld [vmem:[%s398 + $0x160] sm:$0xff]
                  %445 = vst [vmem:[%s399 + $0xb0] sm:$0xff] %v444
                  %v446 = vld [vmem:[%s398 + $0x170] sm:$0xff]
                  %447 = vst [vmem:[%s399 + $0xb8] sm:$0xff] %v446
                  %v448 = vld [vmem:[%s398 + $0x180] sm:$0xff]
                  %449 = vst [vmem:[%s399 + $0xc0] sm:$0xff] %v448
                  %v450 = vld [vmem:[%s398 + $0x190] sm:$0xff]
                  %451 = vst [vmem:[%s399 + $0xc8] sm:$0xff] %v450
                  %v452 = vld [vmem:[%s398 + $0x1a0] sm:$0xff]
                  %453 = vst [vmem:[%s399 + $0xd0] sm:$0xff] %v452
                  %v454 = vld [vmem:[%s398 + $0x1b0] sm:$0xff]
                  %455 = vst [vmem:[%s399 + $0xd8] sm:$0xff] %v454
                  %v456 = vld [vmem:[%s398 + $0x1c0] sm:$0xff]
                  %457 = vst [vmem:[%s399 + $0xe0] sm:$0xff] %v456
                  %v458 = vld [vmem:[%s398 + $0x1d0] sm:$0xff]
                  %459 = vst [vmem:[%s399 + $0xe8] sm:$0xff] %v458
                  %v460 = vld [vmem:[%s398 + $0x1e0] sm:$0xff]
                  %461 = vst [vmem:[%s399 + $0xf0] sm:$0xff] %v460
                  %v462 = vld [vmem:[%s398 + $0x1f0] sm:$0xff]
                  %463 = vst [vmem:[%s399 + $0xf8] sm:$0xff] %v462
                  %v464 = vld [vmem:[%s398 + $0x200] sm:$0xff]
                  %465 = vst [vmem:[%s399 + $0x100] sm:$0xff] %v464
                  %v466 = vld [vmem:[%s398 + $0x210] sm:$0xff]
                  %467 = vst [vmem:[%s399 + $0x108] sm:$0xff] %v466
                  %v468 = vld [vmem:[%s398 + $0x220] sm:$0xff]
                  %469 = vst [vmem:[%s399 + $0x110] sm:$0xff] %v468
                  %v470 = vld [vmem:[%s398 + $0x230] sm:$0xff]
                  %471 = vst [vmem:[%s399 + $0x118] sm:$0xff] %v470
                  %v472 = vld [vmem:[%s398 + $0x240] sm:$0xff]
                  %473 = vst [vmem:[%s399 + $0x120] sm:$0xff] %v472
                  %v474 = vld [vmem:[%s398 + $0x250] sm:$0xff]
                  %475 = vst [vmem:[%s399 + $0x128] sm:$0xff] %v474
                  %v476 = vld [vmem:[%s398 + $0x260] sm:$0xff]
                  %477 = vst [vmem:[%s399 + $0x130] sm:$0xff] %v476
                  %v478 = vld [vmem:[%s398 + $0x270] sm:$0xff]
                  %479 = vst [vmem:[%s399 + $0x138] sm:$0xff] %v478
                  %v480 = vld [vmem:[%s398 + $0x280] sm:$0xff]
                  %481 = vst [vmem:[%s399 + $0x140] sm:$0xff] %v480
                  %v482 = vld [vmem:[%s398 + $0x290] sm:$0xff]
                  %483 = vst [vmem:[%s399 + $0x148] sm:$0xff] %v482
                $region80: #{tpu_custom_call.1} parent=74 // loop_footer
                  %s397 = sadd.s32 1, %s393
                $region81: #{tpu_custom_call.1} parent=74 // loop_footer_branch
                  %392 = sbr.rel target = $region77
                $region82: #{tpu_custom_call.1} parent=74 // loop_exit
                  _
              $region75: #{tpu_custom_call.1} parent=59 // pred_fallthru
                _
              // Predicated region
              $region83: #{tpu_custom_call.1} parent=59 // pred_check
                _
              $region84: #{tpu_custom_call.1} parent=59 // pred_check_branch
                %485 = sbr.rel target = $region86
              $region85: #{tpu_custom_call.1} parent=59 // pred_region
                _
              $region86: #{tpu_custom_call.1} parent=59 // pred_fallthru
                _
            $region60: #{tpu_custom_call.1} parent=55 // pred_fallthru
              _
            // Predicated region
            $region61: #{tpu_custom_call.1} parent=55 // pred_check
              _
            $region62: #{tpu_custom_call.1} parent=55 // pred_check_branch
              %295 = sbr.rel target = $region64
            $region63: #{tpu_custom_call.1} parent=55 // pred_region
              %s297 = ssub.s32 256, 1
              loop: start=0, step=1, limit=1
              $region65: #{tpu_custom_call.1} parent=63 // loop_pre_header
                _
              $region66: #{tpu_custom_call.1} parent=63 // loop_header
                %s299 = sphi 0, %s303
                %p300 = scmp.ge.s32.totalorder %s299, 1
                %s304 = sphi %s289, %s289
                %s305 = sphi %s287, %s287
              $region67: #{tpu_custom_call.1} parent=63 // loop_header_branch
                %302 = sbr.rel (%p300) target = $region71
              $region68: #{tpu_custom_call.1} parent=63 // loop_body
                %v306 = vld [vmem:[%s304] sm:%s297]
                %307 = vst [vmem:[%s305] sm:%s297] %v306
                %v308 = vld [vmem:[%s304 + $0x10] sm:%s297]
                %309 = vst [vmem:[%s305 + $0x8] sm:%s297] %v308
                %v310 = vld [vmem:[%s304 + $0x20] sm:%s297]
                %311 = vst [vmem:[%s305 + $0x10] sm:%s297] %v310
                %v312 = vld [vmem:[%s304 + $0x30] sm:%s297]
                %313 = vst [vmem:[%s305 + $0x18] sm:%s297] %v312
                %v314 = vld [vmem:[%s304 + $0x40] sm:%s297]
                %315 = vst [vmem:[%s305 + $0x20] sm:%s297] %v314
                %v316 = vld [vmem:[%s304 + $0x50] sm:%s297]
                %317 = vst [vmem:[%s305 + $0x28] sm:%s297] %v316
                %v318 = vld [vmem:[%s304 + $0x60] sm:%s297]
                %319 = vst [vmem:[%s305 + $0x30] sm:%s297] %v318
                %v320 = vld [vmem:[%s304 + $0x70] sm:%s297]
                %321 = vst [vmem:[%s305 + $0x38] sm:%s297] %v320
                %v322 = vld [vmem:[%s304 + $0x80] sm:%s297]
                %323 = vst [vmem:[%s305 + $0x40] sm:%s297] %v322
                %v324 = vld [vmem:[%s304 + $0x90] sm:%s297]
                %325 = vst [vmem:[%s305 + $0x48] sm:%s297] %v324
                %v326 = vld [vmem:[%s304 + $0xa0] sm:%s297]
                %327 = vst [vmem:[%s305 + $0x50] sm:%s297] %v326
                %v328 = vld [vmem:[%s304 + $0xb0] sm:%s297]
                %329 = vst [vmem:[%s305 + $0x58] sm:%s297] %v328
                %v330 = vld [vmem:[%s304 + $0xc0] sm:%s297]
                %331 = vst [vmem:[%s305 + $0x60] sm:%s297] %v330
                %v332 = vld [vmem:[%s304 + $0xd0] sm:%s297]
                %333 = vst [vmem:[%s305 + $0x68] sm:%s297] %v332
                %v334 = vld [vmem:[%s304 + $0xe0] sm:%s297]
                %335 = vst [vmem:[%s305 + $0x70] sm:%s297] %v334
                %v336 = vld [vmem:[%s304 + $0xf0] sm:%s297]
                %337 = vst [vmem:[%s305 + $0x78] sm:%s297] %v336
                %v338 = vld [vmem:[%s304 + $0x100] sm:%s297]
                %339 = vst [vmem:[%s305 + $0x80] sm:%s297] %v338
                %v340 = vld [vmem:[%s304 + $0x110] sm:%s297]
                %341 = vst [vmem:[%s305 + $0x88] sm:%s297] %v340
                %v342 = vld [vmem:[%s304 + $0x120] sm:%s297]
                %343 = vst [vmem:[%s305 + $0x90] sm:%s297] %v342
                %v344 = vld [vmem:[%s304 + $0x130] sm:%s297]
                %345 = vst [vmem:[%s305 + $0x98] sm:%s297] %v344
                %v346 = vld [vmem:[%s304 + $0x140] sm:%s297]
                %347 = vst [vmem:[%s305 + $0xa0] sm:%s297] %v346
                %v348 = vld [vmem:[%s304 + $0x150] sm:%s297]
                %349 = vst [vmem:[%s305 + $0xa8] sm:%s297] %v348
                %v350 = vld [vmem:[%s304 + $0x160] sm:%s297]
                %351 = vst [vmem:[%s305 + $0xb0] sm:%s297] %v350
                %v352 = vld [vmem:[%s304 + $0x170] sm:%s297]
                %353 = vst [vmem:[%s305 + $0xb8] sm:%s297] %v352
                %v354 = vld [vmem:[%s304 + $0x180] sm:%s297]
                %355 = vst [vmem:[%s305 + $0xc0] sm:%s297] %v354
                %v356 = vld [vmem:[%s304 + $0x190] sm:%s297]
                %357 = vst [vmem:[%s305 + $0xc8] sm:%s297] %v356
                %v358 = vld [vmem:[%s304 + $0x1a0] sm:%s297]
                %359 = vst [vmem:[%s305 + $0xd0] sm:%s297] %v358
                %v360 = vld [vmem:[%s304 + $0x1b0] sm:%s297]
                %361 = vst [vmem:[%s305 + $0xd8] sm:%s297] %v360
                %v362 = vld [vmem:[%s304 + $0x1c0] sm:%s297]
                %363 = vst [vmem:[%s305 + $0xe0] sm:%s297] %v362
                %v364 = vld [vmem:[%s304 + $0x1d0] sm:%s297]
                %365 = vst [vmem:[%s305 + $0xe8] sm:%s297] %v364
                %v366 = vld [vmem:[%s304 + $0x1e0] sm:%s297]
                %367 = vst [vmem:[%s305 + $0xf0] sm:%s297] %v366
                %v368 = vld [vmem:[%s304 + $0x1f0] sm:%s297]
                %369 = vst [vmem:[%s305 + $0xf8] sm:%s297] %v368
                %v370 = vld [vmem:[%s304 + $0x200] sm:%s297]
                %371 = vst [vmem:[%s305 + $0x100] sm:%s297] %v370
                %v372 = vld [vmem:[%s304 + $0x210] sm:%s297]
                %373 = vst [vmem:[%s305 + $0x108] sm:%s297] %v372
                %v374 = vld [vmem:[%s304 + $0x220] sm:%s297]
                %375 = vst [vmem:[%s305 + $0x110] sm:%s297] %v374
                %v376 = vld [vmem:[%s304 + $0x230] sm:%s297]
                %377 = vst [vmem:[%s305 + $0x118] sm:%s297] %v376
                %v378 = vld [vmem:[%s304 + $0x240] sm:%s297]
                %379 = vst [vmem:[%s305 + $0x120] sm:%s297] %v378
                %v380 = vld [vmem:[%s304 + $0x250] sm:%s297]
                %381 = vst [vmem:[%s305 + $0x128] sm:%s297] %v380
                %v382 = vld [vmem:[%s304 + $0x260] sm:%s297]
                %383 = vst [vmem:[%s305 + $0x130] sm:%s297] %v382
                %v384 = vld [vmem:[%s304 + $0x270] sm:%s297]
                %385 = vst [vmem:[%s305 + $0x138] sm:%s297] %v384
                %v386 = vld [vmem:[%s304 + $0x280] sm:%s297]
                %387 = vst [vmem:[%s305 + $0x140] sm:%s297] %v386
                %v388 = vld [vmem:[%s304 + $0x290] sm:%s297]
                %389 = vst [vmem:[%s305 + $0x148] sm:%s297] %v388
              $region69: #{tpu_custom_call.1} parent=63 // loop_footer
                %s303 = sadd.s32 1, %s299
              $region70: #{tpu_custom_call.1} parent=63 // loop_footer_branch
                %298 = sbr.rel target = $region66
              $region71: #{tpu_custom_call.1} parent=63 // loop_exit
                _
            $region64: #{tpu_custom_call.1} parent=55 // pred_fallthru
              _
          $region56: #{tpu_custom_call.1} parent=51 // pred_fallthru
            _
          %486 = vnop
        $region52: #{tpu_custom_call.1} parent=47 // pred_fallthru
          _
      $region48: #{tpu_custom_call.1} parent=5 // pred_fallthru
        _
      %p487 = scmp.le.s32.totalorder 1, %s18
      %p488 = scmp.lt.s32.totalorder %s18, 3
      %p489 = pnand %p487, %p488
      %p490 = pneg %p489
      // Predicated region
      $region87: #{tpu_custom_call.1} parent=5 // pred_check
        _
      $region88: #{tpu_custom_call.1} parent=5 // pred_check_branch
        %492 = sbr.rel (%p489) target = $region90
      $region89: #{tpu_custom_call.1} parent=5 // pred_region
        %s493 = ssub.s32 %s18, 1
        %s494 = sand.u32 %s31, 1
        %s495 = sand.u32 %s31, 1
        %s496 = smul.addr %s495, 336
        %s497 = scalar_lea.vmem [#allocation2], %s496
        // Predicated region
        $region91: #{tpu_custom_call.1} parent=89 // pred_check
          %p498 = pneg %p44
        $region92: #{tpu_custom_call.1} parent=89 // pred_check_branch
          %500 = sbr.rel (%p498) target = $region94
        $region93: #{tpu_custom_call.1} parent=89 // pred_region
          _
        $region94: #{tpu_custom_call.1} parent=89 // pred_fallthru
          _
        %s501 = sand.u32 %s31, 1
        %s502 = sand.u32 %s31, 1
        %s503 = smul.addr %s502, 336
        %s504 = scalar_lea.vmem [#allocation2], %s503
        %p505 = pneg %p44
        %p506 = pneg %p41
        %p507 = pneg %p65
        %p508 = pneg %p62
        %p509 = pneg %p86
        %p510 = pneg %p83
        %p511 = pneg %p107
        %p512 = pneg %p104
        %p513 = pneg %p128
        %p514 = pneg %p125
        %p515 = pneg %p149
        %p516 = pneg %p146
        %p517 = pneg %p170
        %p518 = pneg %p167
        %p519 = pneg %p191
        %p520 = pneg %p188
        %p521 = pneg %p212
        %p522 = pneg %p209
        %p523 = pneg %p238
        %p524 = pneg %p235
        %s525 = sand.u32 %s225, 1
        %s526 = scalar_lea.sflag [#allocation4], %s525
        %s527 = sand.u32 %s225, 1
        %s528 = smul.addr %s527, 8
        %s529 = scalar_lea.vmem [#allocation3], %s528
        %v530 = vld [vmem:[%s497] sm:$0xff]
        %v531 = vld [vmem:[%s497 + $0x8] sm:$0xff]
        %v532 = vld [vmem:[%s497 + $0x10] sm:$0xff]
        %v533 = vld [vmem:[%s497 + $0x18] sm:$0xff]
        %v534 = vld [vmem:[%s497 + $0x20] sm:$0xff]
        %v535 = vld [vmem:[%s497 + $0x28] sm:$0xff]
        %v536 = vld [vmem:[%s497 + $0x30] sm:$0xff]
        %v537 = vld [vmem:[%s497 + $0x38] sm:$0xff]
        %v538 = vld [vmem:[%s497 + $0x40] sm:$0xff]
        %v539 = vld [vmem:[%s497 + $0x48] sm:$0xff]
        %v540 = vld [vmem:[%s497 + $0x50] sm:$0xff]
        %v541 = vld [vmem:[%s497 + $0x58] sm:$0xff]
        %v542 = vld [vmem:[%s497 + $0x60] sm:$0xff]
        %v543 = vld [vmem:[%s497 + $0x68] sm:$0xff]
        %v544 = vld [vmem:[%s497 + $0x70] sm:$0xff]
        %v545 = vld [vmem:[%s497 + $0x78] sm:$0xff]
        %v546 = vld [vmem:[%s497 + $0x80] sm:$0xff]
        %v547 = vld [vmem:[%s497 + $0x88] sm:$0xff]
        %v548 = vld [vmem:[%s497 + $0x90] sm:$0xff]
        %v549 = vld [vmem:[%s497 + $0x98] sm:$0xff]
        %v550 = vld [vmem:[%s497 + $0xa0] sm:$0xff]
        %v551 = vld [vmem:[%s497 + $0xa8] sm:$0xff]
        %v552 = vld [vmem:[%s497 + $0xb0] sm:$0xff]
        %v553 = vld [vmem:[%s497 + $0xb8] sm:$0xff]
        %v554 = vld [vmem:[%s497 + $0xc0] sm:$0xff]
        %v555 = vld [vmem:[%s497 + $0xc8] sm:$0xff]
        %v556 = vld [vmem:[%s497 + $0xd0] sm:$0xff]
        %v557 = vld [vmem:[%s497 + $0xd8] sm:$0xff]
        %v558 = vld [vmem:[%s497 + $0xe0] sm:$0xff]
        %v559 = vld [vmem:[%s497 + $0xe8] sm:$0xff]
        %v560 = vld [vmem:[%s497 + $0xf0] sm:$0xff]
        %v561 = vld [vmem:[%s497 + $0xf8] sm:$0xff]
        %v562 = vld [vmem:[%s497 + $0x100] sm:$0xff]
        %v563 = vld [vmem:[%s497 + $0x108] sm:$0xff]
        %v564 = vld [vmem:[%s497 + $0x110] sm:$0xff]
        %v565 = vld [vmem:[%s497 + $0x118] sm:$0xff]
        %v566 = vld [vmem:[%s497 + $0x120] sm:$0xff]
        %v567 = vld [vmem:[%s497 + $0x128] sm:$0xff]
        %v568 = vld [vmem:[%s497 + $0x130] sm:$0xff]
        %v569 = vld [vmem:[%s497 + $0x138] sm:$0xff]
        %v570 = vld [vmem:[%s497 + $0x140] sm:$0xff]
        %v571 = vld [vmem:[%s497 + $0x148] sm:$0xff]
        %584 = vrot.lane.b32.xlu0 %v544, 14
        %v585 = vpop.permute.xlu0 %584
        %586 = vrot.lane.b32.xlu0 %v545, 14
        %v587 = vpop.permute.xlu0 %586
        %588 = vrot.lane.b32.xlu0 %v546, 14
        %v589 = vpop.permute.xlu0 %588
        %590 = vrot.lane.b32.xlu0 %v547, 14
        %v591 = vpop.permute.xlu0 %590
        %592 = vrot.lane.b32.xlu0 %v548, 14
        %v593 = vpop.permute.xlu0 %592
        %594 = vrot.lane.b32.xlu0 %v549, 14
        %v595 = vpop.permute.xlu0 %594
        %596 = vrot.lane.b32.xlu0 %v550, 14
        %v597 = vpop.permute.xlu0 %596
        %598 = vrot.lane.b32.xlu0 %v551, 14
        %v599 = vpop.permute.xlu0 %598
        %600 = vrot.lane.b32.xlu0 %v552, 14
        %v601 = vpop.permute.xlu0 %600
        %602 = vrot.lane.b32.xlu0 %v553, 14
        %v603 = vpop.permute.xlu0 %602
        %604 = vrot.lane.b32.xlu0 %v554, 14
        %v605 = vpop.permute.xlu0 %604
        %606 = vrot.lane.b32.xlu0 %v555, 14
        %v607 = vpop.permute.xlu0 %606
        %632 = vrot.lane.b32.xlu0 %v558, 28
        %v633 = vpop.permute.xlu0 %632
        %634 = vrot.lane.b32.xlu0 %v559, 28
        %v635 = vpop.permute.xlu0 %634
        %636 = vrot.lane.b32.xlu0 %v560, 28
        %v637 = vpop.permute.xlu0 %636
        %638 = vrot.lane.b32.xlu0 %v561, 28
        %v639 = vpop.permute.xlu0 %638
        %640 = vrot.lane.b32.xlu0 %v562, 28
        %v641 = vpop.permute.xlu0 %640
        %642 = vrot.lane.b32.xlu0 %v563, 28
        %v643 = vpop.permute.xlu0 %642
        %644 = vrot.lane.b32.xlu0 %v564, 28
        %v645 = vpop.permute.xlu0 %644
        %646 = vrot.lane.b32.xlu0 %v565, 28
        %v647 = vpop.permute.xlu0 %646
        %648 = vrot.lane.b32.xlu0 %v566, 28
        %v649 = vpop.permute.xlu0 %648
        %650 = vrot.lane.b32.xlu0 %v567, 28
        %v651 = vpop.permute.xlu0 %650
        %652 = vrot.lane.b32.xlu0 %v568, 28
        %v653 = vpop.permute.xlu0 %652
        %654 = vrot.lane.b32.xlu0 %v569, 28
        %v655 = vpop.permute.xlu0 %654
        %680 = vrot.lane.b32.xlu0 %v531, 42
        %v681 = vpop.permute.xlu0 %680
        %682 = vrot.lane.b32.xlu0 %v532, 42
        %v683 = vpop.permute.xlu0 %682
        %684 = vrot.lane.b32.xlu0 %v533, 42
        %v685 = vpop.permute.xlu0 %684
        %686 = vrot.lane.b32.xlu0 %v534, 42
        %v687 = vpop.permute.xlu0 %686
        %688 = vrot.lane.b32.xlu0 %v535, 42
        %v689 = vpop.permute.xlu0 %688
        %690 = vrot.lane.b32.xlu0 %v536, 42
        %v691 = vpop.permute.xlu0 %690
        %692 = vrot.lane.b32.xlu0 %v537, 42
        %v693 = vpop.permute.xlu0 %692
        %694 = vrot.lane.b32.xlu0 %v538, 42
        %v695 = vpop.permute.xlu0 %694
        %696 = vrot.lane.b32.xlu0 %v539, 42
        %v697 = vpop.permute.xlu0 %696
        %698 = vrot.lane.b32.xlu0 %v540, 42
        %v699 = vpop.permute.xlu0 %698
        %700 = vrot.lane.b32.xlu0 %v541, 42
        %v701 = vpop.permute.xlu0 %700
        %702 = vrot.lane.b32.xlu0 %v542, 42
        %v703 = vpop.permute.xlu0 %702
        %717 = vrot.lane.b32.xlu0 %v545, 56
        %v718 = vpop.permute.xlu0 %717
        %719 = vrot.lane.b32.xlu0 %v546, 56
        %v720 = vpop.permute.xlu0 %719
        %721 = vrot.lane.b32.xlu0 %v547, 56
        %v722 = vpop.permute.xlu0 %721
        %723 = vrot.lane.b32.xlu0 %v548, 56
        %v724 = vpop.permute.xlu0 %723
        %725 = vrot.lane.b32.xlu0 %v549, 56
        %v726 = vpop.permute.xlu0 %725
        %727 = vrot.lane.b32.xlu0 %v550, 56
        %v728 = vpop.permute.xlu0 %727
        %729 = vrot.lane.b32.xlu0 %v551, 56
        %v730 = vpop.permute.xlu0 %729
        %731 = vrot.lane.b32.xlu0 %v552, 56
        %v732 = vpop.permute.xlu0 %731
        %733 = vrot.lane.b32.xlu0 %v553, 56
        %v734 = vpop.permute.xlu0 %733
        %735 = vrot.lane.b32.xlu0 %v554, 56
        %v736 = vpop.permute.xlu0 %735
        %737 = vrot.lane.b32.xlu0 %v555, 56
        %v738 = vpop.permute.xlu0 %737
        %739 = vrot.lane.b32.xlu0 %v556, 56
        %v740 = vpop.permute.xlu0 %739
        %754 = vrot.lane.b32.xlu0 %v559, 70
        %v755 = vpop.permute.xlu0 %754
        %756 = vrot.lane.b32.xlu0 %v560, 70
        %v757 = vpop.permute.xlu0 %756
        %758 = vrot.lane.b32.xlu0 %v561, 70
        %v759 = vpop.permute.xlu0 %758
        %760 = vrot.lane.b32.xlu0 %v562, 70
        %v761 = vpop.permute.xlu0 %760
        %762 = vrot.lane.b32.xlu0 %v563, 70
        %v763 = vpop.permute.xlu0 %762
        %764 = vrot.lane.b32.xlu0 %v564, 70
        %v765 = vpop.permute.xlu0 %764
        %766 = vrot.lane.b32.xlu0 %v565, 70
        %v767 = vpop.permute.xlu0 %766
        %768 = vrot.lane.b32.xlu0 %v566, 70
        %v769 = vpop.permute.xlu0 %768
        %770 = vrot.lane.b32.xlu0 %v567, 70
        %v771 = vpop.permute.xlu0 %770
        %772 = vrot.lane.b32.xlu0 %v568, 70
        %v773 = vpop.permute.xlu0 %772
        %774 = vrot.lane.b32.xlu0 %v569, 70
        %v775 = vpop.permute.xlu0 %774
        %776 = vrot.lane.b32.xlu0 %v570, 70
        %v777 = vpop.permute.xlu0 %776
        %791 = vrot.lane.b32.xlu0 %v532, 84
        %v792 = vpop.permute.xlu0 %791
        %793 = vrot.lane.b32.xlu0 %v533, 84
        %v794 = vpop.permute.xlu0 %793
        %795 = vrot.lane.b32.xlu0 %v534, 84
        %v796 = vpop.permute.xlu0 %795
        %797 = vrot.lane.b32.xlu0 %v535, 84
        %v798 = vpop.permute.xlu0 %797
        %799 = vrot.lane.b32.xlu0 %v536, 84
        %v800 = vpop.permute.xlu0 %799
        %801 = vrot.lane.b32.xlu0 %v537, 84
        %v802 = vpop.permute.xlu0 %801
        %803 = vrot.lane.b32.xlu0 %v538, 84
        %v804 = vpop.permute.xlu0 %803
        %805 = vrot.lane.b32.xlu0 %v539, 84
        %v806 = vpop.permute.xlu0 %805
        %807 = vrot.lane.b32.xlu0 %v540, 84
        %v808 = vpop.permute.xlu0 %807
        %809 = vrot.lane.b32.xlu0 %v541, 84
        %v810 = vpop.permute.xlu0 %809
        %811 = vrot.lane.b32.xlu0 %v542, 84
        %v812 = vpop.permute.xlu0 %811
        %813 = vrot.lane.b32.xlu0 %v543, 84
        %v814 = vpop.permute.xlu0 %813
        %828 = vrot.lane.b32.xlu0 %v546, 98
        %v829 = vpop.permute.xlu0 %828
        %830 = vrot.lane.b32.xlu0 %v547, 98
        %v831 = vpop.permute.xlu0 %830
        %832 = vrot.lane.b32.xlu0 %v548, 98
        %v833 = vpop.permute.xlu0 %832
        %834 = vrot.lane.b32.xlu0 %v549, 98
        %v835 = vpop.permute.xlu0 %834
        %836 = vrot.lane.b32.xlu0 %v550, 98
        %v837 = vpop.permute.xlu0 %836
        %838 = vrot.lane.b32.xlu0 %v551, 98
        %v839 = vpop.permute.xlu0 %838
        %840 = vrot.lane.b32.xlu0 %v552, 98
        %v841 = vpop.permute.xlu0 %840
        %842 = vrot.lane.b32.xlu0 %v553, 98
        %v843 = vpop.permute.xlu0 %842
        %844 = vrot.lane.b32.xlu0 %v554, 98
        %v845 = vpop.permute.xlu0 %844
        %846 = vrot.lane.b32.xlu0 %v555, 98
        %v847 = vpop.permute.xlu0 %846
        %848 = vrot.lane.b32.xlu0 %v556, 98
        %v849 = vpop.permute.xlu0 %848
        %850 = vrot.lane.b32.xlu0 %v557, 98
        %v851 = vpop.permute.xlu0 %850
        %865 = vrot.lane.b32.xlu0 %v560, 112
        %v866 = vpop.permute.xlu0 %865
        %867 = vrot.lane.b32.xlu0 %v561, 112
        %v868 = vpop.permute.xlu0 %867
        %869 = vrot.lane.b32.xlu0 %v562, 112
        %v870 = vpop.permute.xlu0 %869
        %871 = vrot.lane.b32.xlu0 %v563, 112
        %v872 = vpop.permute.xlu0 %871
        %873 = vrot.lane.b32.xlu0 %v564, 112
        %v874 = vpop.permute.xlu0 %873
        %875 = vrot.lane.b32.xlu0 %v565, 112
        %v876 = vpop.permute.xlu0 %875
        %877 = vrot.lane.b32.xlu0 %v566, 112
        %v878 = vpop.permute.xlu0 %877
        %879 = vrot.lane.b32.xlu0 %v567, 112
        %v880 = vpop.permute.xlu0 %879
        %881 = vrot.lane.b32.xlu0 %v568, 112
        %v882 = vpop.permute.xlu0 %881
        %883 = vrot.lane.b32.xlu0 %v569, 112
        %v884 = vpop.permute.xlu0 %883
        %885 = vrot.lane.b32.xlu0 %v570, 112
        %v886 = vpop.permute.xlu0 %885
        %887 = vrot.lane.b32.xlu0 %v571, 112
        %v888 = vpop.permute.xlu0 %887
        %vm901 = vcmask 113664
        %v902 = vsel %vm901, %v530, %v585
        %v903 = vsel %vm901, %v531, %v587
        %v904 = vsel %vm901, %v532, %v589
        %v905 = vsel %vm901, %v533, %v591
        %v906 = vsel %vm901, %v534, %v593
        %v907 = vsel %vm901, %v535, %v595
        %v908 = vsel %vm901, %v536, %v597
        %v909 = vsel %vm901, %v537, %v599
        %v910 = vsel %vm901, %v538, %v601
        %v911 = vsel %vm901, %v539, %v603
        %v912 = vsel %vm901, %v540, %v605
        %v913 = vsel %vm901, %v541, %v607
        %vm914 = vcmask 228352
        %v915 = vsel %vm914, %v902, %v633
        %v916 = vsel %vm914, %v903, %v635
        %v917 = vsel %vm914, %v904, %v637
        %v918 = vsel %vm914, %v905, %v639
        %v919 = vsel %vm914, %v906, %v641
        %v920 = vsel %vm914, %v907, %v643
        %v921 = vsel %vm914, %v908, %v645
        %v922 = vsel %vm914, %v909, %v647
        %v923 = vsel %vm914, %v910, %v649
        %v924 = vsel %vm914, %v911, %v651
        %v925 = vsel %vm914, %v912, %v653
        %v926 = vsel %vm914, %v913, %v655
        %vm927 = vcmask 343040
        %v928 = vsel %vm927, %v915, %v681
        %v929 = vsel %vm927, %v916, %v683
        %v930 = vsel %vm927, %v917, %v685
        %v931 = vsel %vm927, %v918, %v687
        %v932 = vsel %vm927, %v919, %v689
        %v933 = vsel %vm927, %v920, %v691
        %v934 = vsel %vm927, %v921, %v693
        %v935 = vsel %vm927, %v922, %v695
        %v936 = vsel %vm927, %v923, %v697
        %v937 = vsel %vm927, %v924, %v699
        %v938 = vsel %vm927, %v925, %v701
        %v939 = vsel %vm927, %v926, %v703
        %vm940 = vcmask 457728
        %v941 = vsel %vm940, %v928, %v718
        %v942 = vsel %vm940, %v929, %v720
        %v943 = vsel %vm940, %v930, %v722
        %v944 = vsel %vm940, %v931, %v724
        %v945 = vsel %vm940, %v932, %v726
        %v946 = vsel %vm940, %v933, %v728
        %v947 = vsel %vm940, %v934, %v730
        %v948 = vsel %vm940, %v935, %v732
        %v949 = vsel %vm940, %v936, %v734
        %v950 = vsel %vm940, %v937, %v736
        %v951 = vsel %vm940, %v938, %v738
        %v952 = vsel %vm940, %v939, %v740
        %vm953 = vcmask 572416
        %v954 = vsel %vm953, %v941, %v755
        %v955 = vsel %vm953, %v942, %v757
        %v956 = vsel %vm953, %v943, %v759
        %v957 = vsel %vm953, %v944, %v761
        %v958 = vsel %vm953, %v945, %v763
        %v959 = vsel %vm953, %v946, %v765
        %v960 = vsel %vm953, %v947, %v767
        %v961 = vsel %vm953, %v948, %v769
        %v962 = vsel %vm953, %v949, %v771
        %v963 = vsel %vm953, %v950, %v773
        %v964 = vsel %vm953, %v951, %v775
        %v965 = vsel %vm953, %v952, %v777
        %vm966 = vcmask 687104
        %v967 = vsel %vm966, %v954, %v792
        %v968 = vsel %vm966, %v955, %v794
        %v969 = vsel %vm966, %v956, %v796
        %v970 = vsel %vm966, %v957, %v798
        %v971 = vsel %vm966, %v958, %v800
        %v972 = vsel %vm966, %v959, %v802
        %v973 = vsel %vm966, %v960, %v804
        %v974 = vsel %vm966, %v961, %v806
        %v975 = vsel %vm966, %v962, %v808
        %v976 = vsel %vm966, %v963, %v810
        %v977 = vsel %vm966, %v964, %v812
        %v978 = vsel %vm966, %v965, %v814
        %vm979 = vcmask 801792
        %v980 = vsel %vm979, %v967, %v829
        %v981 = vsel %vm979, %v968, %v831
        %v982 = vsel %vm979, %v969, %v833
        %v983 = vsel %vm979, %v970, %v835
        %v984 = vsel %vm979, %v971, %v837
        %v985 = vsel %vm979, %v972, %v839
        %v986 = vsel %vm979, %v973, %v841
        %v987 = vsel %vm979, %v974, %v843
        %v988 = vsel %vm979, %v975, %v845
        %v989 = vsel %vm979, %v976, %v847
        %v990 = vsel %vm979, %v977, %v849
        %v991 = vsel %vm979, %v978, %v851
        %vm992 = vcmask 916480
        %v993 = vsel %vm992, %v980, %v866
        %v994 = vsel %vm992, %v981, %v868
        %v995 = vsel %vm992, %v982, %v870
        %v996 = vsel %vm992, %v983, %v872
        %v997 = vsel %vm992, %v984, %v874
        %v998 = vsel %vm992, %v985, %v876
        %v999 = vsel %vm992, %v986, %v878
        %v1000 = vsel %vm992, %v987, %v880
        %v1001 = vsel %vm992, %v988, %v882
        %v1002 = vsel %vm992, %v989, %v884
        %v1003 = vsel %vm992, %v990, %v886
        %v1004 = vsel %vm992, %v991, %v888
        %v1005 = vld [vmem:[%s1] sm:$0xff]
        %v1006 = vld [vmem:[%s1 + $0x8] sm:$0xff]
        %v1007 = vld [vmem:[%s1 + $0x10] sm:$0xff]
        %v1008 = vld [vmem:[%s1 + $0x18] sm:$0xff]
        %v1009 = vld [vmem:[%s1 + $0x20] sm:$0xff]
        %v1010 = vld [vmem:[%s1 + $0x28] sm:$0xff]
        %v1011 = vld [vmem:[%s1 + $0x30] sm:$0xff]
        %v1012 = vld [vmem:[%s1 + $0x38] sm:$0xff]
        %v1013 = vld [vmem:[%s1 + $0x40] sm:$0xff]
        %v1014 = vld [vmem:[%s1 + $0x48] sm:$0xff]
        %v1015 = vld [vmem:[%s1 + $0x50] sm:$0xff]
        %v1016 = vld [vmem:[%s1 + $0x58] sm:$0xff]
        %v1017 = vld [vmem:[%s1 + $0x60] sm:$0xff]
        %v1018 = vld [vmem:[%s1 + $0x68] sm:$0xff]
        %v1019 = vld [vmem:[%s1 + $0x70] sm:$0xff]
        %v1020 = vld [vmem:[%s1 + $0x78] sm:$0x3f]
        %v1021 = vld [vmem:[%s2] sm:$0x1]
        %v1023 = vlaneseq
        %v1024 = vshrl.u32 %v1023, 7
        %v1025 = vsub.s32 0, %v1024
        %v1026 = vrot.slane %v1021, %v1025
        %vm1028 = vcmask 1031168
        %v1030 = vsel %vm1028, %v993, 0
        %v1033 = vsel %vm1028, %v994, 0
        %v1036 = vsel %vm1028, %v995, 0
        %v1039 = vsel %vm1028, %v996, 0
        %v1042 = vsel %vm1028, %v997, 0
        %v1045 = vsel %vm1028, %v998, 0
        %v1048 = vsel %vm1028, %v999, 0
        %v1051 = vsel %vm1028, %v1000, 0
        %v1054 = vsel %vm1028, %v1001, 0
        %v1057 = vsel %vm1028, %v1002, 0
        %v1060 = vsel %vm1028, %v1003, 0
        %v1063 = vsel %vm1028, %v1004, 0
        %vm1065 = vcmask 1045504
        %v1067 = vsel %vm1065, %v1020, 0
        %1069 = vmatprep.subr.mxu0 0.0
        %1070 = vmatpush1.msra.mxu0 %v1067
        %1071 = vmatprep.subr.mxu0 0.0
        %1072 = vmatpush1.msra.mxu0 %v1019
        %1073 = vmatprep.subr.mxu0 0.0
        %1074 = vmatpush1.msra.mxu0 %v1018
        %1075 = vmatprep.subr.mxu0 0.0
        %1076 = vmatpush1.msra.mxu0 %v1017
        %1077 = vmatprep.subr.mxu0 0.0
        %1078 = vmatpush1.msra.mxu0 %v1016
        %1079 = vmatprep.subr.mxu0 0.0
        %1080 = vmatpush1.msra.mxu0 %v1015
        %1081 = vmatprep.subr.mxu0 0.0
        %1082 = vmatpush1.msra.mxu0 %v1014
        %1083 = vmatprep.subr.mxu0 0.0
        %1084 = vmatpush1.msra.mxu0 %v1013
        %1085 = vmatprep.subr.mxu0 0.0
        %1086 = vmatpush1.msra.mxu0 %v1012
        %1087 = vmatprep.subr.mxu0 0.0
        %1088 = vmatpush1.msra.mxu0 %v1011
        %1089 = vmatprep.subr.mxu0 0.0
        %1090 = vmatpush1.msra.mxu0 %v1010
        %1091 = vmatprep.subr.mxu0 0.0
        %1092 = vmatpush1.msra.mxu0 %v1009
        %1093 = vmatprep.subr.mxu0 0.0
        %1094 = vmatpush1.msra.mxu0 %v1008
        %1095 = vmatprep.subr.mxu0 0.0
        %1096 = vmatpush1.msra.mxu0 %v1007
        %1097 = vmatprep.subr.mxu0 0.0
        %1098 = vmatpush1.msra.mxu0 %v1006
        %1099 = vmatprep.subr.mxu0 0.0
        %1100 = vmatpush1.msra.mxu0 %v1005
        %1101 = vmatprep.subr.mxu0 0.0
        %1102 = vmatpush2.msra.mxu0 0.0
        %1103 = vmatprep.subr.mxu0 0.0
        %1104 = vmatpush2.msra.mxu0 0.0
        %1105 = vmatprep.subr.mxu0 0.0
        %1106 = vmatpush2.msra.mxu0 0.0
        %1107 = vmatprep.subr.mxu0 0.0
        %1108 = vmatpush2.msra.mxu0 0.0
        %1109 = vmatprep.subr.mxu0 0.0
        %1110 = vmatpush2.msra.mxu0 0.0
        %1111 = vmatprep.subr.mxu0 0.0
        %1112 = vmatpush2.msra.mxu0 0.0
        %1113 = vmatprep.subr.mxu0 0.0
        %1114 = vmatpush2.msra.mxu0 0.0
        %1115 = vmatprep.subr.mxu0 0.0
        %1116 = vmatpush2.msra.mxu0 0.0
        %1117 = vmatprep.subr.mxu0 0.0
        %1118 = vmatpush2.msra.mxu0 0.0
        %1119 = vmatprep.subr.mxu0 0.0
        %1120 = vmatpush2.msra.mxu0 0.0
        %1121 = vmatprep.subr.mxu0 0.0
        %1122 = vmatpush2.msra.mxu0 0.0
        %1123 = vmatprep.subr.mxu0 0.0
        %1124 = vmatpush2.msra.mxu0 0.0
        %1125 = vmatprep.subr.mxu0 0.0
        %1126 = vmatpush2.msra.mxu0 0.0
        %1127 = vmatprep.subr.mxu0 0.0
        %1128 = vmatpush2.msra.mxu0 0.0
        %1129 = vmatprep.subr.mxu0 0.0
        %1130 = vmatpush2.msra.mxu0 0.0
        %1131 = vmatprep.subr.mxu0 0.0
        %1132 = vmatpush2.msra.mxu0 0.0
        %1133 = vmatprep.mubr.f32.mxu0 0.0
        %1134 = vmatmul.mubr.f32.gmra.mxu0 %v1030
        %v1135 = vpop.f32.mrf.mxu0
        %v1136 = vadd.f32 %v1026, %v1135
        %v1137 = vpop.f32.mrf.mxu0
        %1138 = vmatprep.mubr.f32.mxu0 0.0
        %1139 = vmatmul.mubr.f32.gmra.mxu0 %v1033
        %v1140 = vpop.f32.mrf.mxu0
        %v1141 = vadd.f32 %v1026, %v1140
        %v1142 = vpop.f32.mrf.mxu0
        %1143 = vmatprep.mubr.f32.mxu0 0.0
        %1144 = vmatmul.mubr.f32.gmra.mxu0 %v1036
        %v1145 = vpop.f32.mrf.mxu0
        %v1146 = vadd.f32 %v1026, %v1145
        %v1147 = vpop.f32.mrf.mxu0
        %1148 = vmatprep.mubr.f32.mxu0 0.0
        %1149 = vmatmul.mubr.f32.gmra.mxu0 %v1039
        %v1150 = vpop.f32.mrf.mxu0
        %v1151 = vadd.f32 %v1026, %v1150
        %v1152 = vpop.f32.mrf.mxu0
        %1153 = vmatprep.mubr.f32.mxu0 0.0
        %1154 = vmatmul.mubr.f32.gmra.mxu0 %v1042
        %v1155 = vpop.f32.mrf.mxu0
        %v1156 = vadd.f32 %v1026, %v1155
        %v1157 = vpop.f32.mrf.mxu0
        %1158 = vmatprep.mubr.f32.mxu0 0.0
        %1159 = vmatmul.mubr.f32.gmra.mxu0 %v1045
        %v1160 = vpop.f32.mrf.mxu0
        %v1161 = vadd.f32 %v1026, %v1160
        %v1162 = vpop.f32.mrf.mxu0
        %1163 = vmatprep.mubr.f32.mxu0 0.0
        %1164 = vmatmul.mubr.f32.gmra.mxu0 %v1048
        %v1165 = vpop.f32.mrf.mxu0
        %v1166 = vadd.f32 %v1026, %v1165
        %v1167 = vpop.f32.mrf.mxu0
        %1168 = vmatprep.mubr.f32.mxu0 0.0
        %1169 = vmatmul.mubr.f32.gmra.mxu0 %v1051
        %v1170 = vpop.f32.mrf.mxu0
        %v1171 = vadd.f32 %v1026, %v1170
        %v1172 = vpop.f32.mrf.mxu0
        %1173 = vmatprep.mubr.f32.mxu0 0.0
        %1174 = vmatmul.mubr.f32.gmra.mxu0 %v1054
        %v1175 = vpop.f32.mrf.mxu0
        %v1176 = vadd.f32 %v1026, %v1175
        %v1177 = vpop.f32.mrf.mxu0
        %1178 = vmatprep.mubr.f32.mxu0 0.0
        %1179 = vmatmul.mubr.f32.gmra.mxu0 %v1057
        %v1180 = vpop.f32.mrf.mxu0
        %v1181 = vadd.f32 %v1026, %v1180
        %v1182 = vpop.f32.mrf.mxu0
        %1183 = vmatprep.mubr.f32.mxu0 0.0
        %1184 = vmatmul.mubr.f32.gmra.mxu0 %v1060
        %v1185 = vpop.f32.mrf.mxu0
        %v1186 = vadd.f32 %v1026, %v1185
        %v1187 = vpop.f32.mrf.mxu0
        %1188 = vmatprep.mubr.f32.mxu0 0.0
        %1189 = vmatmul.mubr.f32.gmra.mxu0 %v1063
        %v1190 = vpop.f32.mrf.mxu0
        %v1191 = vadd.f32 %v1026, %v1190
        %v1192 = vpop.f32.mrf.mxu0
        %1193 = vdwg.mxu0
        %v1194 = vmax.f32 %v1136, 0.0
        %v1195 = vmax.f32 %v1141, 0.0
        %v1196 = vmax.f32 %v1146, 0.0
        %v1197 = vmax.f32 %v1151, 0.0
        %v1198 = vmax.f32 %v1156, 0.0
        %v1199 = vmax.f32 %v1161, 0.0
        %v1200 = vmax.f32 %v1166, 0.0
        %v1201 = vmax.f32 %v1171, 0.0
        %v1202 = vmax.f32 %v1176, 0.0
        %v1203 = vmax.f32 %v1181, 0.0
        %v1204 = vmax.f32 %v1186, 0.0
        %v1205 = vmax.f32 %v1191, 0.0
        %1216 = vrot.lane.b32.xlu0 %v1195, 72
        %v1217 = vpop.permute.xlu0 %1216
        %1218 = vrot.lane.b32.xlu0 %v1196, 72
        %v1219 = vpop.permute.xlu0 %1218
        %1220 = vrot.lane.b32.xlu0 %v1197, 72
        %v1221 = vpop.permute.xlu0 %1220
        %1222 = vrot.lane.b32.xlu0 %v1198, 72
        %v1223 = vpop.permute.xlu0 %1222
        %1224 = vrot.lane.b32.xlu0 %v1199, 72
        %v1225 = vpop.permute.xlu0 %1224
        %1226 = vrot.lane.b32.xlu0 %v1200, 72
        %v1227 = vpop.permute.xlu0 %1226
        %1228 = vrot.lane.b32.xlu0 %v1201, 72
        %v1229 = vpop.permute.xlu0 %1228
        %1230 = vrot.lane.b32.xlu0 %v1202, 72
        %v1231 = vpop.permute.xlu0 %1230
        %1232 = vrot.lane.b32.xlu0 %v1203, 72
        %v1233 = vpop.permute.xlu0 %1232
        %1234 = vrot.lane.b32.xlu0 %v1204, 72
        %v1235 = vpop.permute.xlu0 %1234
        %1247 = vrot.lane.b32.xlu0 %v1196, 16
        %v1248 = vpop.permute.xlu0 %1247
        %1249 = vrot.lane.b32.xlu0 %v1197, 16
        %v1250 = vpop.permute.xlu0 %1249
        %1251 = vrot.lane.b32.xlu0 %v1198, 16
        %v1252 = vpop.permute.xlu0 %1251
        %1253 = vrot.lane.b32.xlu0 %v1199, 16
        %v1254 = vpop.permute.xlu0 %1253
        %1255 = vrot.lane.b32.xlu0 %v1200, 16
        %v1256 = vpop.permute.xlu0 %1255
        %1257 = vrot.lane.b32.xlu0 %v1201, 16
        %v1258 = vpop.permute.xlu0 %1257
        %1259 = vrot.lane.b32.xlu0 %v1202, 16
        %v1260 = vpop.permute.xlu0 %1259
        %1261 = vrot.lane.b32.xlu0 %v1203, 16
        %v1262 = vpop.permute.xlu0 %1261
        %1263 = vrot.lane.b32.xlu0 %v1204, 16
        %v1264 = vpop.permute.xlu0 %1263
        %1265 = vrot.lane.b32.xlu0 %v1205, 16
        %v1266 = vpop.permute.xlu0 %1265
        %vm1277 = vcmask 588800
        %v1278 = vsel %vm1277, %v1194, %v1217
        %v1279 = vsel %vm1277, %v1195, %v1219
        %v1280 = vsel %vm1277, %v1196, %v1221
        %v1281 = vsel %vm1277, %v1197, %v1223
        %v1282 = vsel %vm1277, %v1198, %v1225
        %v1283 = vsel %vm1277, %v1199, %v1227
        %v1284 = vsel %vm1277, %v1200, %v1229
        %v1285 = vsel %vm1277, %v1201, %v1231
        %v1286 = vsel %vm1277, %v1202, %v1233
        %v1287 = vsel %vm1277, %v1203, %v1235
        %vm1288 = vcmask 130048
        %v1289 = vsel %vm1288, %v1217, %v1248
        %v1290 = vsel %vm1288, %v1219, %v1250
        %v1291 = vsel %vm1288, %v1221, %v1252
        %v1292 = vsel %vm1288, %v1223, %v1254
        %v1293 = vsel %vm1288, %v1225, %v1256
        %v1294 = vsel %vm1288, %v1227, %v1258
        %v1295 = vsel %vm1288, %v1229, %v1260
        %v1296 = vsel %vm1288, %v1231, %v1262
        %v1297 = vsel %vm1288, %v1233, %v1264
        %v1298 = vsel %vm1288, %v1235, %v1266
        %v1299 = vld [vmem:[%s3] sm:$0xff]
        %v1300 = vld [vmem:[%s3 + $0x8] sm:$0xff]
        %v1301 = vld [vmem:[%s3 + $0x10] sm:$0xff]
        %v1302 = vld [vmem:[%s3 + $0x18] sm:$0xff]
        %v1303 = vld [vmem:[%s3 + $0x20] sm:$0xff]
        %v1304 = vld [vmem:[%s3 + $0x28] sm:$0xff]
        %v1305 = vld [vmem:[%s3 + $0x30] sm:$0xff]
        %v1306 = vld [vmem:[%s3 + $0x38] sm:$0xff]
        %v1307 = vld [vmem:[%s3 + $0x40] sm:$0xff]
        %v1308 = vld [vmem:[%s3 + $0x48] sm:$0xff]
        %v1309 = vld [vmem:[%s3 + $0x50] sm:$0xff]
        %v1310 = vld [vmem:[%s3 + $0x58] sm:$0xff]
        %v1311 = vld [vmem:[%s3 + $0x60] sm:$0xff]
        %v1312 = vld [vmem:[%s3 + $0x68] sm:$0xff]
        %v1313 = vld [vmem:[%s3 + $0x70] sm:$0xff]
        %v1314 = vld [vmem:[%s3 + $0x78] sm:$0xff]
        %v1315 = vld [vmem:[%s3 + $0x80] sm:$0xff]
        %v1316 = vld [vmem:[%s3 + $0x88] sm:$0xff]
        %v1317 = vld [vmem:[%s3 + $0x90] sm:$0xff]
        %v1318 = vld [vmem:[%s3 + $0x98] sm:$0xff]
        %v1319 = vld [vmem:[%s3 + $0xa0] sm:$0xff]
        %v1320 = vld [vmem:[%s3 + $0xa8] sm:$0xff]
        %v1321 = vld [vmem:[%s3 + $0xb0] sm:$0xff]
        %v1322 = vld [vmem:[%s3 + $0xb8] sm:$0xff]
        %v1323 = vld [vmem:[%s3 + $0xc0] sm:$0xff]
        %v1324 = vld [vmem:[%s3 + $0xc8] sm:$0xff]
        %v1325 = vld [vmem:[%s3 + $0xd0] sm:$0xff]
        %v1326 = vld [vmem:[%s4] sm:$0x1]
        %v1328 = vlaneseq
        %v1329 = vshrl.u32 %v1328, 7
        %v1330 = vsub.s32 0, %v1329
        %v1331 = vrot.slane %v1326, %v1330
        %vm1333 = vcmask 719872
        %v1335 = vsel %vm1333, %v1289, 0
        %v1338 = vsel %vm1333, %v1290, 0
        %v1341 = vsel %vm1333, %v1291, 0
        %v1344 = vsel %vm1333, %v1292, 0
        %v1347 = vsel %vm1333, %v1293, 0
        %v1350 = vsel %vm1333, %v1294, 0
        %v1353 = vsel %vm1333, %v1295, 0
        %v1356 = vsel %vm1333, %v1296, 0
        %v1359 = vsel %vm1333, %v1297, 0
        %v1362 = vsel %vm1333, %v1298, 0
        %1364 = vmatprep.subr.mxu0 0.0
        %1365 = vmatpush1.msra.mxu0 %v1314
        %1366 = vmatprep.subr.mxu0 0.0
        %1367 = vmatpush1.msra.mxu0 %v1313
        %1368 = vmatprep.subr.mxu0 0.0
        %1369 = vmatpush1.msra.mxu0 %v1312
        %1370 = vmatprep.subr.mxu0 0.0
        %1371 = vmatpush1.msra.mxu0 %v1311
        %1372 = vmatprep.subr.mxu0 0.0
        %1373 = vmatpush1.msra.mxu0 %v1310
        %1374 = vmatprep.subr.mxu0 0.0
        %1375 = vmatpush1.msra.mxu0 %v1309
        %1376 = vmatprep.subr.mxu0 0.0
        %1377 = vmatpush1.msra.mxu0 %v1308
        %1378 = vmatprep.subr.mxu0 0.0
        %1379 = vmatpush1.msra.mxu0 %v1307
        %1380 = vmatprep.subr.mxu0 0.0
        %1381 = vmatpush1.msra.mxu0 %v1306
        %1382 = vmatprep.subr.mxu0 0.0
        %1383 = vmatpush1.msra.mxu0 %v1305
        %1384 = vmatprep.subr.mxu0 0.0
        %1385 = vmatpush1.msra.mxu0 %v1304
        %1386 = vmatprep.subr.mxu0 0.0
        %1387 = vmatpush1.msra.mxu0 %v1303
        %1388 = vmatprep.subr.mxu0 0.0
        %1389 = vmatpush1.msra.mxu0 %v1302
        %1390 = vmatprep.subr.mxu0 0.0
        %1391 = vmatpush1.msra.mxu0 %v1301
        %1392 = vmatprep.subr.mxu0 0.0
        %1393 = vmatpush1.msra.mxu0 %v1300
        %1394 = vmatprep.subr.mxu0 0.0
        %1395 = vmatpush1.msra.mxu0 %v1299
        %1396 = vmatprep.subr.mxu0 0.0
        %1397 = vmatpush2.msra.mxu0 0.0
        %1398 = vmatprep.subr.mxu0 0.0
        %1399 = vmatpush2.msra.mxu0 0.0
        %1400 = vmatprep.subr.mxu0 0.0
        %1401 = vmatpush2.msra.mxu0 0.0
        %1402 = vmatprep.subr.mxu0 0.0
        %1403 = vmatpush2.msra.mxu0 0.0
        %1404 = vmatprep.subr.mxu0 0.0
        %1405 = vmatpush2.msra.mxu0 0.0
        %1406 = vmatprep.subr.mxu0 0.0
        %1407 = vmatpush2.msra.mxu0 %v1325
        %1408 = vmatprep.subr.mxu0 0.0
        %1409 = vmatpush2.msra.mxu0 %v1324
        %1410 = vmatprep.subr.mxu0 0.0
        %1411 = vmatpush2.msra.mxu0 %v1323
        %1412 = vmatprep.subr.mxu0 0.0
        %1413 = vmatpush2.msra.mxu0 %v1322
        %1414 = vmatprep.subr.mxu0 0.0
        %1415 = vmatpush2.msra.mxu0 %v1321
        %1416 = vmatprep.subr.mxu0 0.0
        %1417 = vmatpush2.msra.mxu0 %v1320
        %1418 = vmatprep.subr.mxu0 0.0
        %1419 = vmatpush2.msra.mxu0 %v1319
        %1420 = vmatprep.subr.mxu0 0.0
        %1421 = vmatpush2.msra.mxu0 %v1318
        %1422 = vmatprep.subr.mxu0 0.0
        %1423 = vmatpush2.msra.mxu0 %v1317
        %1424 = vmatprep.subr.mxu0 0.0
        %1425 = vmatpush2.msra.mxu0 %v1316
        %1426 = vmatprep.subr.mxu0 0.0
        %1427 = vmatpush2.msra.mxu0 %v1315
        %1428 = vmatprep.mubr.f32.mxu0 %v1335
        %1429 = vmatmul.mubr.f32.gmra.mxu0 %v1278
        %v1430 = vpop.f32.mrf.mxu0
        %v1431 = vadd.f32 %v1331, %v1430
        %v1432 = vpop.f32.mrf.mxu0
        %1433 = vmatprep.mubr.f32.mxu0 %v1338
        %1434 = vmatmul.mubr.f32.gmra.mxu0 %v1279
        %v1435 = vpop.f32.mrf.mxu0
        %v1436 = vadd.f32 %v1331, %v1435
        %v1437 = vpop.f32.mrf.mxu0
        %1438 = vmatprep.mubr.f32.mxu0 %v1341
        %1439 = vmatmul.mubr.f32.gmra.mxu0 %v1280
        %v1440 = vpop.f32.mrf.mxu0
        %v1441 = vadd.f32 %v1331, %v1440
        %v1442 = vpop.f32.mrf.mxu0
        %1443 = vmatprep.mubr.f32.mxu0 %v1344
        %1444 = vmatmul.mubr.f32.gmra.mxu0 %v1281
        %v1445 = vpop.f32.mrf.mxu0
        %v1446 = vadd.f32 %v1331, %v1445
        %v1447 = vpop.f32.mrf.mxu0
        %1448 = vmatprep.mubr.f32.mxu0 %v1347
        %1449 = vmatmul.mubr.f32.gmra.mxu0 %v1282
        %v1450 = vpop.f32.mrf.mxu0
        %v1451 = vadd.f32 %v1331, %v1450
        %v1452 = vpop.f32.mrf.mxu0
        %1453 = vmatprep.mubr.f32.mxu0 %v1350
        %1454 = vmatmul.mubr.f32.gmra.mxu0 %v1283
        %v1455 = vpop.f32.mrf.mxu0
        %v1456 = vadd.f32 %v1331, %v1455
        %v1457 = vpop.f32.mrf.mxu0
        %1458 = vmatprep.mubr.f32.mxu0 %v1353
        %1459 = vmatmul.mubr.f32.gmra.mxu0 %v1284
        %v1460 = vpop.f32.mrf.mxu0
        %v1461 = vadd.f32 %v1331, %v1460
        %v1462 = vpop.f32.mrf.mxu0
        %1463 = vmatprep.mubr.f32.mxu0 %v1356
        %1464 = vmatmul.mubr.f32.gmra.mxu0 %v1285
        %v1465 = vpop.f32.mrf.mxu0
        %v1466 = vadd.f32 %v1331, %v1465
        %v1467 = vpop.f32.mrf.mxu0
        %1468 = vmatprep.mubr.f32.mxu0 %v1359
        %1469 = vmatmul.mubr.f32.gmra.mxu0 %v1286
        %v1470 = vpop.f32.mrf.mxu0
        %v1471 = vadd.f32 %v1331, %v1470
        %v1472 = vpop.f32.mrf.mxu0
        %1473 = vmatprep.mubr.f32.mxu0 %v1362
        %1474 = vmatmul.mubr.f32.gmra.mxu0 %v1287
        %v1475 = vpop.f32.mrf.mxu0
        %v1476 = vadd.f32 %v1331, %v1475
        %v1477 = vpop.f32.mrf.mxu0
        %1478 = vdwg.mxu0
        %v1479 = vmax.f32 %v1431, 0.0
        %v1480 = vmax.f32 %v1436, 0.0
        %v1481 = vmax.f32 %v1441, 0.0
        %v1482 = vmax.f32 %v1446, 0.0
        %v1483 = vmax.f32 %v1451, 0.0
        %v1484 = vmax.f32 %v1456, 0.0
        %v1485 = vmax.f32 %v1461, 0.0
        %v1486 = vmax.f32 %v1466, 0.0
        %v1487 = vmax.f32 %v1471, 0.0
        %v1488 = vmax.f32 %v1476, 0.0
        %1499 = vrot.lane.b32.xlu0 %v1479, 118
        %v1500 = vpop.permute.xlu0 %1499
        %1501 = vrot.lane.b32.xlu0 %v1480, 118
        %v1502 = vpop.permute.xlu0 %1501
        %1503 = vrot.lane.b32.xlu0 %v1481, 118
        %v1504 = vpop.permute.xlu0 %1503
        %1505 = vrot.lane.b32.xlu0 %v1482, 118
        %v1506 = vpop.permute.xlu0 %1505
        %1507 = vrot.lane.b32.xlu0 %v1483, 118
        %v1508 = vpop.permute.xlu0 %1507
        %1509 = vrot.lane.b32.xlu0 %v1484, 118
        %v1510 = vpop.permute.xlu0 %1509
        %1511 = vrot.lane.b32.xlu0 %v1485, 118
        %v1512 = vpop.permute.xlu0 %1511
        %1513 = vrot.lane.b32.xlu0 %v1486, 118
        %v1514 = vpop.permute.xlu0 %1513
        %1515 = vrot.lane.b32.xlu0 %v1487, 118
        %v1516 = vpop.permute.xlu0 %1515
        %1517 = vrot.lane.b32.xlu0 %v1488, 118
        %v1518 = vpop.permute.xlu0 %1517
        %v1529 = vmax.f32 %v1479, %v1500
        %v1530 = vmax.f32 %v1480, %v1502
        %v1531 = vmax.f32 %v1481, %v1504
        %v1532 = vmax.f32 %v1482, %v1506
        %v1533 = vmax.f32 %v1483, %v1508
        %v1534 = vmax.f32 %v1484, %v1510
        %v1535 = vmax.f32 %v1485, %v1512
        %v1536 = vmax.f32 %v1486, %v1514
        %v1537 = vmax.f32 %v1487, %v1516
        %v1538 = vmax.f32 %v1488, %v1518
        %1549 = vrot.lane.b32.xlu0 %v1529, 118
        %v1550 = vpop.permute.xlu0 %1549
        %1551 = vrot.lane.b32.xlu0 %v1530, 118
        %v1552 = vpop.permute.xlu0 %1551
        %1553 = vrot.lane.b32.xlu0 %v1531, 118
        %v1554 = vpop.permute.xlu0 %1553
        %1555 = vrot.lane.b32.xlu0 %v1532, 118
        %v1556 = vpop.permute.xlu0 %1555
        %1557 = vrot.lane.b32.xlu0 %v1533, 118
        %v1558 = vpop.permute.xlu0 %1557
        %1559 = vrot.lane.b32.xlu0 %v1534, 118
        %v1560 = vpop.permute.xlu0 %1559
        %1561 = vrot.lane.b32.xlu0 %v1535, 118
        %v1562 = vpop.permute.xlu0 %1561
        %1563 = vrot.lane.b32.xlu0 %v1536, 118
        %v1564 = vpop.permute.xlu0 %1563
        %1565 = vrot.lane.b32.xlu0 %v1537, 118
        %v1566 = vpop.permute.xlu0 %1565
        %1567 = vrot.lane.b32.xlu0 %v1538, 118
        %v1568 = vpop.permute.xlu0 %1567
        %1579 = vrot.lane.b32.xlu0 %v1529, 108
        %v1580 = vpop.permute.xlu0 %1579
        %1581 = vrot.lane.b32.xlu0 %v1530, 108
        %v1582 = vpop.permute.xlu0 %1581
        %1583 = vrot.lane.b32.xlu0 %v1531, 108
        %v1584 = vpop.permute.xlu0 %1583
        %1585 = vrot.lane.b32.xlu0 %v1532, 108
        %v1586 = vpop.permute.xlu0 %1585
        %1587 = vrot.lane.b32.xlu0 %v1533, 108
        %v1588 = vpop.permute.xlu0 %1587
        %1589 = vrot.lane.b32.xlu0 %v1534, 108
        %v1590 = vpop.permute.xlu0 %1589
        %1591 = vrot.lane.b32.xlu0 %v1535, 108
        %v1592 = vpop.permute.xlu0 %1591
        %1593 = vrot.lane.b32.xlu0 %v1536, 108
        %v1594 = vpop.permute.xlu0 %1593
        %1595 = vrot.lane.b32.xlu0 %v1537, 108
        %v1596 = vpop.permute.xlu0 %1595
        %1597 = vrot.lane.b32.xlu0 %v1538, 108
        %v1598 = vpop.permute.xlu0 %1597
        %1609 = vrot.lane.b32.xlu0 %v1529, 98
        %v1610 = vpop.permute.xlu0 %1609
        %1611 = vrot.lane.b32.xlu0 %v1530, 98
        %v1612 = vpop.permute.xlu0 %1611
        %1613 = vrot.lane.b32.xlu0 %v1531, 98
        %v1614 = vpop.permute.xlu0 %1613
        %1615 = vrot.lane.b32.xlu0 %v1532, 98
        %v1616 = vpop.permute.xlu0 %1615
        %1617 = vrot.lane.b32.xlu0 %v1533, 98
        %v1618 = vpop.permute.xlu0 %1617
        %1619 = vrot.lane.b32.xlu0 %v1534, 98
        %v1620 = vpop.permute.xlu0 %1619
        %1621 = vrot.lane.b32.xlu0 %v1535, 98
        %v1622 = vpop.permute.xlu0 %1621
        %1623 = vrot.lane.b32.xlu0 %v1536, 98
        %v1624 = vpop.permute.xlu0 %1623
        %1625 = vrot.lane.b32.xlu0 %v1537, 98
        %v1626 = vpop.permute.xlu0 %1625
        %1627 = vrot.lane.b32.xlu0 %v1538, 98
        %v1628 = vpop.permute.xlu0 %1627
        %1639 = vrot.lane.b32.xlu0 %v1529, 88
        %v1640 = vpop.permute.xlu0 %1639
        %1641 = vrot.lane.b32.xlu0 %v1530, 88
        %v1642 = vpop.permute.xlu0 %1641
        %1643 = vrot.lane.b32.xlu0 %v1531, 88
        %v1644 = vpop.permute.xlu0 %1643
        %1645 = vrot.lane.b32.xlu0 %v1532, 88
        %v1646 = vpop.permute.xlu0 %1645
        %1647 = vrot.lane.b32.xlu0 %v1533, 88
        %v1648 = vpop.permute.xlu0 %1647
        %1649 = vrot.lane.b32.xlu0 %v1534, 88
        %v1650 = vpop.permute.xlu0 %1649
        %1651 = vrot.lane.b32.xlu0 %v1535, 88
        %v1652 = vpop.permute.xlu0 %1651
        %1653 = vrot.lane.b32.xlu0 %v1536, 88
        %v1654 = vpop.permute.xlu0 %1653
        %1655 = vrot.lane.b32.xlu0 %v1537, 88
        %v1656 = vpop.permute.xlu0 %1655
        %1657 = vrot.lane.b32.xlu0 %v1538, 88
        %v1658 = vpop.permute.xlu0 %1657
        %vm1669 = vcmask 80896
        %v1670 = vsel %vm1669, %v1529, %v1550
        %v1671 = vsel %vm1669, %v1530, %v1552
        %v1672 = vsel %vm1669, %v1531, %v1554
        %v1673 = vsel %vm1669, %v1532, %v1556
        %v1674 = vsel %vm1669, %v1533, %v1558
        %v1675 = vsel %vm1669, %v1534, %v1560
        %v1676 = vsel %vm1669, %v1535, %v1562
        %v1677 = vsel %vm1669, %v1536, %v1564
        %v1678 = vsel %vm1669, %v1537, %v1566
        %v1679 = vsel %vm1669, %v1538, %v1568
        %vm1680 = vcmask 162816
        %v1681 = vsel %vm1680, %v1670, %v1580
        %v1682 = vsel %vm1680, %v1671, %v1582
        %v1683 = vsel %vm1680, %v1672, %v1584
        %v1684 = vsel %vm1680, %v1673, %v1586
        %v1685 = vsel %vm1680, %v1674, %v1588
        %v1686 = vsel %vm1680, %v1675, %v1590
        %v1687 = vsel %vm1680, %v1676, %v1592
        %v1688 = vsel %vm1680, %v1677, %v1594
        %v1689 = vsel %vm1680, %v1678, %v1596
        %v1690 = vsel %vm1680, %v1679, %v1598
        %vm1691 = vcmask 244736
        %v1692 = vsel %vm1691, %v1681, %v1610
        %v1693 = vsel %vm1691, %v1682, %v1612
        %v1694 = vsel %vm1691, %v1683, %v1614
        %v1695 = vsel %vm1691, %v1684, %v1616
        %v1696 = vsel %vm1691, %v1685, %v1618
        %v1697 = vsel %vm1691, %v1686, %v1620
        %v1698 = vsel %vm1691, %v1687, %v1622
        %v1699 = vsel %vm1691, %v1688, %v1624
        %v1700 = vsel %vm1691, %v1689, %v1626
        %v1701 = vsel %vm1691, %v1690, %v1628
        %vm1702 = vcmask 326656
        %v1703 = vsel %vm1702, %v1692, %v1640
        %v1704 = vsel %vm1702, %v1693, %v1642
        %v1705 = vsel %vm1702, %v1694, %v1644
        %v1706 = vsel %vm1702, %v1695, %v1646
        %v1707 = vsel %vm1702, %v1696, %v1648
        %v1708 = vsel %vm1702, %v1697, %v1650
        %v1709 = vsel %vm1702, %v1698, %v1652
        %v1710 = vsel %vm1702, %v1699, %v1654
        %v1711 = vsel %vm1702, %v1700, %v1656
        %v1712 = vsel %vm1702, %v1701, %v1658
        %v1713 = vmax.f32 %v1703, %v1704
        %v1714 = vmax.f32 %v1705, %v1706
        %v1715 = vmax.f32 %v1707, %v1708
        %v1716 = vmax.f32 %v1709, %v1710
        %v1717 = vmax.f32 %v1711, %v1712
        %1719 = vrot.lane.b32.xlu0 %v1714, 50
        %v1720 = vpop.permute.xlu0 %1719
        %1723 = vrot.lane.b32.xlu0 %v1715, 100
        %v1724 = vpop.permute.xlu0 %1723
        %1727 = vrot.lane.b32.xlu0 %v1716, 22
        %v1728 = vpop.permute.xlu0 %1727
        %1731 = vrot.lane.b32.xlu0 %v1717, 72
        %v1732 = vpop.permute.xlu0 %1731
        %vm1734 = vcmask 408576
        %v1735 = vsel %vm1734, %v1713, %v1720
        %vm1736 = vcmask 818176
        %v1737 = vsel %vm1736, %v1735, %v1724
        %vm1738 = vcmask 179200
        %v1739 = vsel %vm1738, %v1724, %v1728
        %v1740 = vsel %vm1277, %v1739, %v1732
        %v1741 = vld [vmem:[%s5] sm:$0xff]
        %v1742 = vld [vmem:[%s5 + $0x8] sm:$0xff]
        %v1743 = vld [vmem:[%s5 + $0x10] sm:$0xff]
        %v1744 = vld [vmem:[%s5 + $0x18] sm:$0xff]
        %v1745 = vld [vmem:[%s5 + $0x20] sm:$0xff]
        %v1746 = vld [vmem:[%s5 + $0x28] sm:$0xff]
        %v1747 = vld [vmem:[%s5 + $0x30] sm:$0xff]
        %v1748 = vld [vmem:[%s5 + $0x38] sm:$0xff]
        %v1749 = vld [vmem:[%s5 + $0x40] sm:$0xff]
        %v1750 = vld [vmem:[%s5 + $0x48] sm:$0xff]
        %v1751 = vld [vmem:[%s5 + $0x50] sm:$0xff]
        %v1752 = vld [vmem:[%s5 + $0x58] sm:$0xff]
        %v1753 = vld [vmem:[%s5 + $0x60] sm:$0xff]
        %v1754 = vld [vmem:[%s5 + $0x68] sm:$0xff]
        %v1755 = vld [vmem:[%s5 + $0x70] sm:$0xff]
        %v1756 = vld [vmem:[%s5 + $0x78] sm:$0xff]
        %v1757 = vld [vmem:[%s5 + $0x80] sm:$0xff]
        %v1758 = vld [vmem:[%s5 + $0x88] sm:$0xff]
        %v1759 = vld [vmem:[%s5 + $0x90] sm:$0xff]
        %v1760 = vld [vmem:[%s5 + $0x98] sm:$0xff]
        %v1761 = vld [vmem:[%s5 + $0xa0] sm:$0xff]
        %v1762 = vld [vmem:[%s5 + $0xa8] sm:$0xff]
        %v1763 = vld [vmem:[%s5 + $0xb0] sm:$0xff]
        %v1764 = vld [vmem:[%s5 + $0xb8] sm:$0xff]
        %v1765 = vld [vmem:[%s5 + $0xc0] sm:$0xff]
        %v1766 = vld [vmem:[%s5 + $0xc8] sm:$0xff]
        %v1767 = vld [vmem:[%s5 + $0xd0] sm:$0xff]
        %v1768 = vld [vmem:[%s5 + $0xd8] sm:$0xff]
        %v1769 = vld [vmem:[%s5 + $0xe0] sm:$0xff]
        %v1770 = vld [vmem:[%s5 + $0xe8] sm:$0xff]
        %v1771 = vld [vmem:[%s5 + $0xf0] sm:$0xff]
        %v1772 = vld [vmem:[%s5 + $0xf8] sm:$0x3]
        %v1773 = vld [vmem:[%s6] sm:$0x1]
        %v1775 = vlaneseq
        %v1776 = vshrl.u32 %v1775, 7
        %v1777 = vsub.s32 0, %v1776
        %v1778 = vrot.slane %v1773, %v1777
        %vm1780 = vcmask 998400
        %v1782 = vsel %vm1780, %v1740, 0
        %vm1784 = vcmask 1041408
        %v1786 = vsel %vm1784, %v1772, 0
        %1788 = vmatprep.subr.mxu0 0.0
        %1789 = vmatpush1.msra.mxu0 %v1756
        %1790 = vmatprep.subr.mxu0 0.0
        %1791 = vmatpush1.msra.mxu0 %v1755
        %1792 = vmatprep.subr.mxu0 0.0
        %1793 = vmatpush1.msra.mxu0 %v1754
        %1794 = vmatprep.subr.mxu0 0.0
        %1795 = vmatpush1.msra.mxu0 %v1753
        %1796 = vmatprep.subr.mxu0 0.0
        %1797 = vmatpush1.msra.mxu0 %v1752
        %1798 = vmatprep.subr.mxu0 0.0
        %1799 = vmatpush1.msra.mxu0 %v1751
        %1800 = vmatprep.subr.mxu0 0.0
        %1801 = vmatpush1.msra.mxu0 %v1750
        %1802 = vmatprep.subr.mxu0 0.0
        %1803 = vmatpush1.msra.mxu0 %v1749
        %1804 = vmatprep.subr.mxu0 0.0
        %1805 = vmatpush1.msra.mxu0 %v1748
        %1806 = vmatprep.subr.mxu0 0.0
        %1807 = vmatpush1.msra.mxu0 %v1747
        %1808 = vmatprep.subr.mxu0 0.0
        %1809 = vmatpush1.msra.mxu0 %v1746
        %1810 = vmatprep.subr.mxu0 0.0
        %1811 = vmatpush1.msra.mxu0 %v1745
        %1812 = vmatprep.subr.mxu0 0.0
        %1813 = vmatpush1.msra.mxu0 %v1744
        %1814 = vmatprep.subr.mxu0 0.0
        %1815 = vmatpush1.msra.mxu0 %v1743
        %1816 = vmatprep.subr.mxu0 0.0
        %1817 = vmatpush1.msra.mxu0 %v1742
        %1818 = vmatprep.subr.mxu0 0.0
        %1819 = vmatpush1.msra.mxu0 %v1741
        %1820 = vmatprep.subr.mxu0 0.0
        %1821 = vmatpush2.msra.mxu0 %v1786
        %1822 = vmatprep.subr.mxu0 0.0
        %1823 = vmatpush2.msra.mxu0 %v1771
        %1824 = vmatprep.subr.mxu0 0.0
        %1825 = vmatpush2.msra.mxu0 %v1770
        %1826 = vmatprep.subr.mxu0 0.0
        %1827 = vmatpush2.msra.mxu0 %v1769
        %1828 = vmatprep.subr.mxu0 0.0
        %1829 = vmatpush2.msra.mxu0 %v1768
        %1830 = vmatprep.subr.mxu0 0.0
        %1831 = vmatpush2.msra.mxu0 %v1767
        %1832 = vmatprep.subr.mxu0 0.0
        %1833 = vmatpush2.msra.mxu0 %v1766
        %1834 = vmatprep.subr.mxu0 0.0
        %1835 = vmatpush2.msra.mxu0 %v1765
        %1836 = vmatprep.subr.mxu0 0.0
        %1837 = vmatpush2.msra.mxu0 %v1764
        %1838 = vmatprep.subr.mxu0 0.0
        %1839 = vmatpush2.msra.mxu0 %v1763
        %1840 = vmatprep.subr.mxu0 0.0
        %1841 = vmatpush2.msra.mxu0 %v1762
        %1842 = vmatprep.subr.mxu0 0.0
        %1843 = vmatpush2.msra.mxu0 %v1761
        %1844 = vmatprep.subr.mxu0 0.0
        %1845 = vmatpush2.msra.mxu0 %v1760
        %1846 = vmatprep.subr.mxu0 0.0
        %1847 = vmatpush2.msra.mxu0 %v1759
        %1848 = vmatprep.subr.mxu0 0.0
        %1849 = vmatpush2.msra.mxu0 %v1758
        %1850 = vmatprep.subr.mxu0 0.0
        %1851 = vmatpush2.msra.mxu0 %v1757
        %1852 = vmatprep.mubr.f32.mxu0 %v1782
        %1853 = vmatmul.mubr.f32.gmra.mxu0 %v1737
        %v1854 = vpop.f32.mrf.mxu0
        %v1855 = vadd.f32 %v1778, %v1854
        %v1856 = vpop.f32.mrf.mxu0
        %1857 = vdwg.mxu0
        %v1858 = vmax.f32 %v1855, 0.0
        %v1859 = vld [vmem:[%s7] sm:$0xff]
        %v1860 = vld [vmem:[%s7 + $0x8] sm:$0xff]
        %v1861 = vld [vmem:[%s7 + $0x10] sm:$0xff]
        %v1862 = vld [vmem:[%s7 + $0x18] sm:$0xff]
        %v1863 = vld [vmem:[%s7 + $0x20] sm:$0xff]
        %v1864 = vld [vmem:[%s7 + $0x28] sm:$0xff]
        %v1865 = vld [vmem:[%s7 + $0x30] sm:$0xff]
        %v1866 = vld [vmem:[%s7 + $0x38] sm:$0xff]
        %v1867 = vld [vmem:[%s8] sm:$0x1]
        %v1869 = vlaneseq
        %v1870 = vshrl.u32 %v1869, 7
        %v1871 = vsub.s32 0, %v1870
        %v1872 = vrot.slane %v1867, %v1871
        %vm1874 = vcmask 523264
        %v1876 = vsel %vm1874, %v1858, 0
        %1878 = vmatprep.subr.mxu0 0.0
        %1879 = vmatpush1.msra.mxu0 0.0
        %1880 = vmatprep.subr.mxu0 0.0
        %1881 = vmatpush1.msra.mxu0 0.0
        %1882 = vmatprep.subr.mxu0 0.0
        %1883 = vmatpush1.msra.mxu0 0.0
        %1884 = vmatprep.subr.mxu0 0.0
        %1885 = vmatpush1.msra.mxu0 0.0
        %1886 = vmatprep.subr.mxu0 0.0
        %1887 = vmatpush1.msra.mxu0 0.0
        %1888 = vmatprep.subr.mxu0 0.0
        %1889 = vmatpush1.msra.mxu0 0.0
        %1890 = vmatprep.subr.mxu0 0.0
        %1891 = vmatpush1.msra.mxu0 0.0
        %1892 = vmatprep.subr.mxu0 0.0
        %1893 = vmatpush1.msra.mxu0 0.0
        %1894 = vmatprep.subr.mxu0 0.0
        %1895 = vmatpush1.msra.mxu0 %v1866
        %1896 = vmatprep.subr.mxu0 0.0
        %1897 = vmatpush1.msra.mxu0 %v1865
        %1898 = vmatprep.subr.mxu0 0.0
        %1899 = vmatpush1.msra.mxu0 %v1864
        %1900 = vmatprep.subr.mxu0 0.0
        %1901 = vmatpush1.msra.mxu0 %v1863
        %1902 = vmatprep.subr.mxu0 0.0
        %1903 = vmatpush1.msra.mxu0 %v1862
        %1904 = vmatprep.subr.mxu0 0.0
        %1905 = vmatpush1.msra.mxu0 %v1861
        %1906 = vmatprep.subr.mxu0 0.0
        %1907 = vmatpush1.msra.mxu0 %v1860
        %1908 = vmatprep.subr.mxu0 0.0
        %1909 = vmatpush1.msra.mxu0 %v1859
        %1910 = vmatprep.subr.mxu0 0.0
        %1911 = vmatpush2.msra.mxu0 0.0
        %1912 = vmatprep.subr.mxu0 0.0
        %1913 = vmatpush2.msra.mxu0 0.0
        %1914 = vmatprep.subr.mxu0 0.0
        %1915 = vmatpush2.msra.mxu0 0.0
        %1916 = vmatprep.subr.mxu0 0.0
        %1917 = vmatpush2.msra.mxu0 0.0
        %1918 = vmatprep.subr.mxu0 0.0
        %1919 = vmatpush2.msra.mxu0 0.0
        %1920 = vmatprep.subr.mxu0 0.0
        %1921 = vmatpush2.msra.mxu0 0.0
        %1922 = vmatprep.subr.mxu0 0.0
        %1923 = vmatpush2.msra.mxu0 0.0
        %1924 = vmatprep.subr.mxu0 0.0
        %1925 = vmatpush2.msra.mxu0 0.0
        %1926 = vmatprep.subr.mxu0 0.0
        %1927 = vmatpush2.msra.mxu0 0.0
        %1928 = vmatprep.subr.mxu0 0.0
        %1929 = vmatpush2.msra.mxu0 0.0
        %1930 = vmatprep.subr.mxu0 0.0
        %1931 = vmatpush2.msra.mxu0 0.0
        %1932 = vmatprep.subr.mxu0 0.0
        %1933 = vmatpush2.msra.mxu0 0.0
        %1934 = vmatprep.subr.mxu0 0.0
        %1935 = vmatpush2.msra.mxu0 0.0
        %1936 = vmatprep.subr.mxu0 0.0
        %1937 = vmatpush2.msra.mxu0 0.0
        %1938 = vmatprep.subr.mxu0 0.0
        %1939 = vmatpush2.msra.mxu0 0.0
        %1940 = vmatprep.subr.mxu0 0.0
        %1941 = vmatpush2.msra.mxu0 0.0
        %1942 = vmatprep.mubr.f32.mxu0 0.0
        %1943 = vmatmul.mubr.f32.gmra.mxu0 %v1876
        %v1944 = vpop.f32.mrf.mxu0
        %v1945 = vadd.f32 %v1872, %v1944
        %v1946 = vpop.f32.mrf.mxu0
        %1947 = vdwg.mxu0
        %1948 = vmax.xlane.f32.xlu0 %v1945
        %v1949 = vpop.xlane.xlu0 %1948
        %v1950 = vsub.f32 %v1945, %v1949
        %v1951 = vmul.f32 %v1950, 1.442695
        %v1952 = vpow.pop %v1951
        %1953 = vadd.xlane.f32.xlu0 %v1952
        %v1954 = vpop.xlane.xlu0 %1953
        %v1955 = vrcp.pop %v1954
        %v1956 = vmul.f32 %v1952, %v1955
        %1957 = vst [vmem:[%s529] sm:$0xff] %v1956
        %s1958 = sand.u32 %s225, 1
        %s1959 = scalar_lea.sflag [#allocation4], %s1958
        %s1960 = sand.u32 %s225, 1
        %s1961 = smul.addr %s1960, 8
        %s1962 = scalar_lea.vmem [#allocation3], %s1961
        // Predicated region
        $region95: #{tpu_custom_call.1} parent=89 // pred_check
          %p1963 = pneg %p235
        $region96: #{tpu_custom_call.1} parent=89 // pred_check_branch
          %1965 = sbr.rel (%p1963) target = $region98
        $region97: #{tpu_custom_call.1} parent=89 // pred_region
          %s1967 = ssub.s32 128, 128
          %1968 = vsyncadd %s1959, %s1967
          %s1969 = smul.addr %s23, 128
          %s1970 = scalar_lea.hbm %s9, %s1969
          %s1972 = sshll.u32 %s1962, 4
          %s1973 = int_to_ptr.vmem [resolvable:$true] %s1972
          %1975 = dma.vmem_to_hbm [thread:$0]  %s1973, 128, %s1970, %s1959
        $region98: #{tpu_custom_call.1} parent=89 // pred_fallthru
          _
      $region90: #{tpu_custom_call.1} parent=5 // pred_fallthru
        _
      %p1976 = scmp.le.s32.totalorder 2, %s18
      // Predicated region
      $region99: #{tpu_custom_call.1} parent=5 // pred_check
        %p1977 = pneg %p1976
      $region100: #{tpu_custom_call.1} parent=5 // pred_check_branch
        %1979 = sbr.rel (%p1977) target = $region102
      $region101: #{tpu_custom_call.1} parent=5 // pred_region
        %s1980 = ssub.s32 %s18, 2
        // Predicated region
        $region103: #{tpu_custom_call.1} parent=101 // pred_check
          %p1981 = pneg %p241
        $region104: #{tpu_custom_call.1} parent=101 // pred_check_branch
          %1983 = sbr.rel (%p1981) target = $region106
        $region105: #{tpu_custom_call.1} parent=101 // pred_region
          %s1984 = sand.u32 %s226, 1
          %s1985 = scalar_lea.sflag [#allocation4], %s1984
          %s1986 = sand.u32 %s226, 1
          %s1987 = smul.addr %s1986, 8
          %s1988 = scalar_lea.vmem [#allocation3], %s1987
          %1989 = dma.done %s1985, 128
        $region106: #{tpu_custom_call.1} parent=101 // pred_fallthru
          _
      $region102: #{tpu_custom_call.1} parent=5 // pred_fallthru
        _
    $region6: #{tpu_custom_call.1} parent=1 // loop_footer
      %s22 = sadd.s32 1, %s18
    $region7: #{tpu_custom_call.1} parent=1 // loop_footer_branch
      %17 = sbr.rel target = $region3
    $region8: #{tpu_custom_call.1} parent=1 // loop_exit
      _
    %1990 = vsyncpa [#allocation4], 1
    %s1991 = scalar_lea.sflag [#allocation4], 1
    %1992 = vsyncpa %s1991, 1

</llo_original>
